<compile_context>
chip_gen: v7x
topology: tpu7x:2x2x1
jax: 0.10.0
libtpu: 0.0.40
codegen_flags: <defaults>
</compile_context>

<pallas_src>
import functools

import jax
import jax.numpy as jnp
from jax import lax
from jax.experimental import pallas as pl
from jax.experimental.pallas import tpu as pltpu

EMB_DIM = 32    # fixed by the PyTorch module (embeddings are (*, 32))
OUT_LANES = 128 # lane-dense partial-sum output width


def _loss_kernel(idx_ref,        # SMEM (B*S,) int32  -- scalar-prefetched item ids
                 u_ref,          # VMEM (1, 1, D)     -- user_embedding_update block
                 lbl_ref,        # VMEM (1, 1, S)     -- labels block
                 msk_ref,        # VMEM (1, 1, S)     -- mdsk block
                 tab_hbm,        # ANY  (N, D)        -- item-embedding table (stays in HBM)
                 out_ref,        # VMEM (1, 1, 128)   -- per-batch partial sums
                 emb_buf,        # VMEM scratch (S, D) table dtype
                 sems,           # DMA semaphores (S,)
                 *, seq):
    b = pl.program_id(0)
    base = b * seq

    # --- DMA row gather: S concurrent (1, D) row copies HBM -> VMEM scratch ---
    copies = []
    for s in range(seq):                       # static unroll; seq is small
        row = idx_ref[base + s]                # scalar read from SMEM
        cp = pltpu.make_async_copy(tab_hbm.at[pl.ds(row, 1)],
                                   emb_buf.at[pl.ds(s, 1)],
                                   sems.at[s])
        cp.start()
        copies.append(cp)
    for cp in copies:
        cp.wait()

    emb = emb_buf[...].astype(jnp.float32)     # (S, D); no-op cast for f32 table
    u = u_ref[0].astype(jnp.float32)           # (1, D)

    # logits (1, S) = u (1, D) . emb (S, D)^T  -- lane-dense (S on lanes).
    logits = lax.dot_general(u, emb, (((1,), (1,)), ((), ())),
                             preferred_element_type=jnp.float32)

    y = lbl_ref[0].astype(jnp.float32)         # (1, S)
    m = msk_ref[0].astype(jnp.float32)         # (1, S)

    # Numerically-stable BCEWithLogitsLoss(reduction='none'):
    #   max(x, 0) - x*y + log(1 + exp(-|x|))
    bce = (jnp.maximum(logits, 0.0)
           - logits * y
           + jnp.log1p(jnp.exp(-jnp.abs(logits))))
    pred_err = jnp.sum(bce * m)

    u_sq = jnp.sum(u * u)                      # partial ||u||^2 for this batch
    e_sq = jnp.sum(emb * emb)                  # partial ||emb[item]||^2

    # Pack the three partial sums into lanes 0..2 of a full 128-lane slab
    # (unmasked, lane-dense store).
    lane = lax.broadcasted_iota(jnp.int32, (1, out_ref.shape[-1]), 1)
    partial = jnp.where(lane == 0, pred_err,
              jnp.where(lane == 1, u_sq,
              jnp.where(lane == 2, e_sq, 0.0)))
    out_ref[0] = partial


def _pallas_forward(user_embedding_update, item, labels, mdsk,
                    item_embeddings, lam_u):
    B = user_embedding_update.shape[0]
    D = user_embedding_update.shape[-1]
    S = item.shape[1]

    # Glue: metadata-level reshapes only; NO gather, NO dtype casts on big data.
    idx = item.reshape(B * S).astype(jnp.int32)            # scalar-prefetch operand
    lbl = labels.reshape(B, 1, S)
    msk = mdsk.reshape(B, 1, S)

    kernel = functools.partial(_loss_kernel, seq=S)

    partials = pl.pallas_call(
        kernel,
        out_shape=jax.ShapeDtypeStruct((B, 1, OUT_LANES), jnp.float32),
        grid_spec=pltpu.PrefetchScalarGridSpec(
            num_scalar_prefetch=1,
            grid=(B,),
            in_specs=[
                pl.BlockSpec((1, 1, D), lambda b, idx: (b, 0, 0)),   # u
                pl.BlockSpec((1, 1, S), lambda b, idx: (b, 0, 0)),   # labels
                pl.BlockSpec((1, 1, S), lambda b, idx: (b, 0, 0)),   # mdsk
                pl.BlockSpec(memory_space=pl.ANY),                   # table in HBM
            ],
            out_specs=pl.BlockSpec((1, 1, OUT_LANES),
                                   lambda b, idx: (b, 0, 0)),
            scratch_shapes=[
                pltpu.VMEM((S, D), item_embeddings.dtype),           # gathered rows
                pltpu.SemaphoreType.DMA((S,)),                       # one sem per row DMA
            ]),
        compiler_params=pltpu.CompilerParams(
            dimension_semantics=("parallel",)),
    )(idx, user_embedding_update, lbl, msk, item_embeddings)

    # Tiny scalar epilogue (a handful of flops) -- keeps the batch axis parallel.
    pred_err = jnp.sum(partials[:, 0, 0])
    u_sq = jnp.sum(partials[:, 0, 1])
    e_sq = jnp.sum(partials[:, 0, 2])
    return pred_err + lam_u * (jnp.sqrt(u_sq) + jnp.sqrt(e_sq))


class UserPreferenceEstimator:
    """JAX/Pallas port of the PyTorch `user_preference_estimator` module."""

    def __init__(self, item_num, regs=0.01, local_lr=0.01, key=None):
        if key is None:
            key = jax.random.PRNGKey(0)
        k_user, k_item = jax.random.split(key)
        self.lam_u = float(regs)
        self.local_lr = float(local_lr)
        self.item_num = int(item_num)
        # TODO(synk): real module loads ./pretrain/<dataset>/item_pretrained.npy;
        # here item embeddings are randomly initialized (no file I/O allowed).
        self.user_embeddings = 0.01 * jax.random.normal(
            k_user, (1, EMB_DIM), dtype=jnp.float32)
        item_emb = 0.01 * jax.random.normal(
            k_item, (self.item_num + 1, EMB_DIM), dtype=jnp.float32)
        # last row is the zero / padding embedding, as in the PyTorch module
        self.item_embeddings = item_emb.at[-1].set(0.0)

    def forward(self, user_embedding_update, item, labels, mdsk):
        return _pallas_forward(user_embedding_update, item, labels, mdsk,
                               self.item_embeddings, self.lam_u)

    # pure-JAX reference for sanity checking
    def forward_ref(self, user_embedding_update, item, labels, mdsk):
        emb = self.item_embeddings[item]                              # (B, S, D)
        logits = jnp.einsum('bod,bsd->bos', user_embedding_update,
                            emb)[:, 0, :]                             # (B, S)
        bce = (jnp.maximum(logits, 0.0) - logits * labels
               + jnp.log1p(jnp.exp(-jnp.abs(logits))))
        pred_err = jnp.sum(bce * mdsk)
        reg = self.lam_u * (jnp.linalg.norm(user_embedding_update)
                            + jnp.linalg.norm(emb))
        return pred_err + reg


if __name__ == "__main__":
    key = jax.random.PRNGKey(0)
    k_model, k_u, k_item, k_lbl, k_msk = jax.random.split(key, 5)

    ITEM_NUM = 50   # synthetic item catalogue size
    B, S, D = 2, 8, EMB_DIM

    model = UserPreferenceEstimator(ITEM_NUM, regs=0.01, local_lr=0.01, key=k_model)

    # forward() inputs (matching PyTorch shapes / dtypes):
    user_embedding_update = 0.01 * jax.random.normal(k_u, (B, 1, D), dtype=jnp.float32)
    item = jax.random.randint(k_item, (B, S), 0, ITEM_NUM + 1)        # int indices
    labels = jax.random.bernoulli(k_lbl, 0.5, (B, S)).astype(jnp.float32)
    mdsk = jax.random.bernoulli(k_msk, 0.8, (B, S)).astype(jnp.float32)

    loss = model.forward(user_embedding_update, item, labels, mdsk)
    loss = jax.block_until_ready(loss)

    loss_ref = jax.block_until_ready(
        model.forward_ref(user_embedding_update, item, labels, mdsk))
    assert jnp.allclose(loss, loss_ref, rtol=1e-3, atol=1e-3), (loss, loss_ref)

    print("KERNEL_OK")
</pallas_src>

<mosaic_0001>
module attributes {stable_mosaic.version = 11 : i64} {
  func.func @_loss_kernel(%arg0: i32, %arg1: memref<16xi32, #tpu.memory_space<smem>>, %arg2: memref<1x1x32xf32, #tpu.memory_space<vmem>>, %arg3: memref<1x1x8xf32, #tpu.memory_space<vmem>>, %arg4: memref<1x1x8xf32, #tpu.memory_space<vmem>>, %arg5: memref<51x32xf32, #tpu.memory_space<any>>, %arg6: memref<1x1x128xf32, #tpu.memory_space<vmem>>, %arg7: memref<8x32xf32, #tpu.memory_space<vmem>>, %arg8: memref<8x!tpu.dma_semaphore, #tpu.memory_space<semaphore_mem>>) attributes {dimension_semantics = [#tpu.dimension_semantics<parallel>], iteration_bounds = array<i64: 2>, scalar_prefetch = 1 : i64, scratch_operands = 2 : i64, tpu.core_type = #tpu.core_type<tc>, window_params = [{transform_indices = @transform_0, window_bounds = array<i64: 1, 1, 32>}, {transform_indices = @transform_1, window_bounds = array<i64: 1, 1, 8>}, {transform_indices = @transform_2, window_bounds = array<i64: 1, 1, 8>}, {}, {transform_indices = @transform_4, window_bounds = array<i64: 1, 1, 128>}]} {
    %c8_i32 = arith.constant 8 : i32
    %0 = arith.muli %arg0, %c8_i32 : i32
    %c0_i32 = arith.constant 0 : i32
    %1 = arith.addi %0, %c0_i32 : i32
    %2 = arith.index_cast %1 : i32 to index
    %3 = memref.load %arg1[%2] : memref<16xi32, #tpu.memory_space<smem>>
    %c0_i32_0 = arith.constant 0 : i32
    %c0_i32_1 = arith.constant 0 : i32
    %4 = tpu.memref_slice %arg5[%3, %c0_i32_1] : memref<51x32xf32, #tpu.memory_space<any>> -> memref<1x32xf32, #tpu.memory_space<any>>
    %c0_i32_2 = arith.constant 0 : i32
    %c0_i32_3 = arith.constant 0 : i32
    %5 = tpu.memref_slice %arg7[%c0_i32_2, %c0_i32_3] : memref<8x32xf32, #tpu.memory_space<vmem>> -> memref<1x32xf32, #tpu.memory_space<vmem>>
    %6 = tpu.memref_slice %arg8[%c0_i32_0] : memref<8x!tpu.dma_semaphore, #tpu.memory_space<semaphore_mem>> -> memref<1x!tpu.dma_semaphore, #tpu.memory_space<semaphore_mem>>
    %7 = tpu.memref_squeeze %6 : memref<1x!tpu.dma_semaphore, #tpu.memory_space<semaphore_mem>> -> memref<!tpu.dma_semaphore, #tpu.memory_space<semaphore_mem>>
    tpu.enqueue_dma source(%4 : memref<1x32xf32, #tpu.memory_space<any>>) target(%5 : memref<1x32xf32, #tpu.memory_space<vmem>>) target_semaphore(%7 : memref<!tpu.dma_semaphore, #tpu.memory_space<semaphore_mem>>)
    %c1_i32 = arith.constant 1 : i32
    %8 = arith.addi %0, %c1_i32 : i32
    %9 = arith.index_cast %8 : i32 to index
    %10 = memref.load %arg1[%9] : memref<16xi32, #tpu.memory_space<smem>>
    %c1_i32_4 = arith.constant 1 : i32
    %c0_i32_5 = arith.constant 0 : i32
    %11 = tpu.memref_slice %arg5[%10, %c0_i32_5] : memref<51x32xf32, #tpu.memory_space<any>> -> memref<1x32xf32, #tpu.memory_space<any>>
    %c1_i32_6 = arith.constant 1 : i32
    %c0_i32_7 = arith.constant 0 : i32
    %12 = tpu.memref_slice %arg7[%c1_i32_6, %c0_i32_7] : memref<8x32xf32, #tpu.memory_space<vmem>> -> memref<1x32xf32, #tpu.memory_space<vmem>>
    %13 = tpu.memref_slice %arg8[%c1_i32_4] : memref<8x!tpu.dma_semaphore, #tpu.memory_space<semaphore_mem>> -> memref<1x!tpu.dma_semaphore, #tpu.memory_space<semaphore_mem>>
    %14 = tpu.memref_squeeze %13 : memref<1x!tpu.dma_semaphore, #tpu.memory_space<semaphore_mem>> -> memref<!tpu.dma_semaphore, #tpu.memory_space<semaphore_mem>>
    tpu.enqueue_dma source(%11 : memref<1x32xf32, #tpu.memory_space<any>>) target(%12 : memref<1x32xf32, #tpu.memory_space<vmem>>) target_semaphore(%14 : memref<!tpu.dma_semaphore, #tpu.memory_space<semaphore_mem>>)
    %c2_i32 = arith.constant 2 : i32
    %15 = arith.addi %0, %c2_i32 : i32
    %16 = arith.index_cast %15 : i32 to index
    %17 = memref.load %arg1[%16] : memref<16xi32, #tpu.memory_space<smem>>
    %c2_i32_8 = arith.constant 2 : i32
    %c0_i32_9 = arith.constant 0 : i32
    %18 = tpu.memref_slice %arg5[%17, %c0_i32_9] : memref<51x32xf32, #tpu.memory_space<any>> -> memref<1x32xf32, #tpu.memory_space<any>>
    %c2_i32_10 = arith.constant 2 : i32
    %c0_i32_11 = arith.constant 0 : i32
    %19 = tpu.memref_slice %arg7[%c2_i32_10, %c0_i32_11] : memref<8x32xf32, #tpu.memory_space<vmem>> -> memref<1x32xf32, #tpu.memory_space<vmem>>
    %20 = tpu.memref_slice %arg8[%c2_i32_8] : memref<8x!tpu.dma_semaphore, #tpu.memory_space<semaphore_mem>> -> memref<1x!tpu.dma_semaphore, #tpu.memory_space<semaphore_mem>>
    %21 = tpu.memref_squeeze %20 : memref<1x!tpu.dma_semaphore, #tpu.memory_space<semaphore_mem>> -> memref<!tpu.dma_semaphore, #tpu.memory_space<semaphore_mem>>
    tpu.enqueue_dma source(%18 : memref<1x32xf32, #tpu.memory_space<any>>) target(%19 : memref<1x32xf32, #tpu.memory_space<vmem>>) target_semaphore(%21 : memref<!tpu.dma_semaphore, #tpu.memory_space<semaphore_mem>>)
    %c3_i32 = arith.constant 3 : i32
    %22 = arith.addi %0, %c3_i32 : i32
    %23 = arith.index_cast %22 : i32 to index
    %24 = memref.load %arg1[%23] : memref<16xi32, #tpu.memory_space<smem>>
    %c3_i32_12 = arith.constant 3 : i32
    %c0_i32_13 = arith.constant 0 : i32
    %25 = tpu.memref_slice %arg5[%24, %c0_i32_13] : memref<51x32xf32, #tpu.memory_space<any>> -> memref<1x32xf32, #tpu.memory_space<any>>
    %c3_i32_14 = arith.constant 3 : i32
    %c0_i32_15 = arith.constant 0 : i32
    %26 = tpu.memref_slice %arg7[%c3_i32_14, %c0_i32_15] : memref<8x32xf32, #tpu.memory_space<vmem>> -> memref<1x32xf32, #tpu.memory_space<vmem>>
    %27 = tpu.memref_slice %arg8[%c3_i32_12] : memref<8x!tpu.dma_semaphore, #tpu.memory_space<semaphore_mem>> -> memref<1x!tpu.dma_semaphore, #tpu.memory_space<semaphore_mem>>
    %28 = tpu.memref_squeeze %27 : memref<1x!tpu.dma_semaphore, #tpu.memory_space<semaphore_mem>> -> memref<!tpu.dma_semaphore, #tpu.memory_space<semaphore_mem>>
    tpu.enqueue_dma source(%25 : memref<1x32xf32, #tpu.memory_space<any>>) target(%26 : memref<1x32xf32, #tpu.memory_space<vmem>>) target_semaphore(%28 : memref<!tpu.dma_semaphore, #tpu.memory_space<semaphore_mem>>)
    %c4_i32 = arith.constant 4 : i32
    %29 = arith.addi %0, %c4_i32 : i32
    %30 = arith.index_cast %29 : i32 to index
    %31 = memref.load %arg1[%30] : memref<16xi32, #tpu.memory_space<smem>>
    %c4_i32_16 = arith.constant 4 : i32
    %c0_i32_17 = arith.constant 0 : i32
    %32 = tpu.memref_slice %arg5[%31, %c0_i32_17] : memref<51x32xf32, #tpu.memory_space<any>> -> memref<1x32xf32, #tpu.memory_space<any>>
    %c4_i32_18 = arith.constant 4 : i32
    %c0_i32_19 = arith.constant 0 : i32
    %33 = tpu.memref_slice %arg7[%c4_i32_18, %c0_i32_19] : memref<8x32xf32, #tpu.memory_space<vmem>> -> memref<1x32xf32, #tpu.memory_space<vmem>>
    %34 = tpu.memref_slice %arg8[%c4_i32_16] : memref<8x!tpu.dma_semaphore, #tpu.memory_space<semaphore_mem>> -> memref<1x!tpu.dma_semaphore, #tpu.memory_space<semaphore_mem>>
    %35 = tpu.memref_squeeze %34 : memref<1x!tpu.dma_semaphore, #tpu.memory_space<semaphore_mem>> -> memref<!tpu.dma_semaphore, #tpu.memory_space<semaphore_mem>>
    tpu.enqueue_dma source(%32 : memref<1x32xf32, #tpu.memory_space<any>>) target(%33 : memref<1x32xf32, #tpu.memory_space<vmem>>) target_semaphore(%35 : memref<!tpu.dma_semaphore, #tpu.memory_space<semaphore_mem>>)
    %c5_i32 = arith.constant 5 : i32
    %36 = arith.addi %0, %c5_i32 : i32
    %37 = arith.index_cast %36 : i32 to index
    %38 = memref.load %arg1[%37] : memref<16xi32, #tpu.memory_space<smem>>
    %c5_i32_20 = arith.constant 5 : i32
    %c0_i32_21 = arith.constant 0 : i32
    %39 = tpu.memref_slice %arg5[%38, %c0_i32_21] : memref<51x32xf32, #tpu.memory_space<any>> -> memref<1x32xf32, #tpu.memory_space<any>>
    %c5_i32_22 = arith.constant 5 : i32
    %c0_i32_23 = arith.constant 0 : i32
    %40 = tpu.memref_slice %arg7[%c5_i32_22, %c0_i32_23] : memref<8x32xf32, #tpu.memory_space<vmem>> -> memref<1x32xf32, #tpu.memory_space<vmem>>
    %41 = tpu.memref_slice %arg8[%c5_i32_20] : memref<8x!tpu.dma_semaphore, #tpu.memory_space<semaphore_mem>> -> memref<1x!tpu.dma_semaphore, #tpu.memory_space<semaphore_mem>>
    %42 = tpu.memref_squeeze %41 : memref<1x!tpu.dma_semaphore, #tpu.memory_space<semaphore_mem>> -> memref<!tpu.dma_semaphore, #tpu.memory_space<semaphore_mem>>
    tpu.enqueue_dma source(%39 : memref<1x32xf32, #tpu.memory_space<any>>) target(%40 : memref<1x32xf32, #tpu.memory_space<vmem>>) target_semaphore(%42 : memref<!tpu.dma_semaphore, #tpu.memory_space<semaphore_mem>>)
    %c6_i32 = arith.constant 6 : i32
    %43 = arith.addi %0, %c6_i32 : i32
    %44 = arith.index_cast %43 : i32 to index
    %45 = memref.load %arg1[%44] : memref<16xi32, #tpu.memory_space<smem>>
    %c6_i32_24 = arith.constant 6 : i32
    %c0_i32_25 = arith.constant 0 : i32
    %46 = tpu.memref_slice %arg5[%45, %c0_i32_25] : memref<51x32xf32, #tpu.memory_space<any>> -> memref<1x32xf32, #tpu.memory_space<any>>
    %c6_i32_26 = arith.constant 6 : i32
    %c0_i32_27 = arith.constant 0 : i32
    %47 = tpu.memref_slice %arg7[%c6_i32_26, %c0_i32_27] : memref<8x32xf32, #tpu.memory_space<vmem>> -> memref<1x32xf32, #tpu.memory_space<vmem>>
    %48 = tpu.memref_slice %arg8[%c6_i32_24] : memref<8x!tpu.dma_semaphore, #tpu.memory_space<semaphore_mem>> -> memref<1x!tpu.dma_semaphore, #tpu.memory_space<semaphore_mem>>
    %49 = tpu.memref_squeeze %48 : memref<1x!tpu.dma_semaphore, #tpu.memory_space<semaphore_mem>> -> memref<!tpu.dma_semaphore, #tpu.memory_space<semaphore_mem>>
    tpu.enqueue_dma source(%46 : memref<1x32xf32, #tpu.memory_space<any>>) target(%47 : memref<1x32xf32, #tpu.memory_space<vmem>>) target_semaphore(%49 : memref<!tpu.dma_semaphore, #tpu.memory_space<semaphore_mem>>)
    %c7_i32 = arith.constant 7 : i32
    %50 = arith.addi %0, %c7_i32 : i32
    %51 = arith.index_cast %50 : i32 to index
    %52 = memref.load %arg1[%51] : memref<16xi32, #tpu.memory_space<smem>>
    %c7_i32_28 = arith.constant 7 : i32
    %c0_i32_29 = arith.constant 0 : i32
    %53 = tpu.memref_slice %arg5[%52, %c0_i32_29] : memref<51x32xf32, #tpu.memory_space<any>> -> memref<1x32xf32, #tpu.memory_space<any>>
    %c7_i32_30 = arith.constant 7 : i32
    %c0_i32_31 = arith.constant 0 : i32
    %54 = tpu.memref_slice %arg7[%c7_i32_30, %c0_i32_31] : memref<8x32xf32, #tpu.memory_space<vmem>> -> memref<1x32xf32, #tpu.memory_space<vmem>>
    %55 = tpu.memref_slice %arg8[%c7_i32_28] : memref<8x!tpu.dma_semaphore, #tpu.memory_space<semaphore_mem>> -> memref<1x!tpu.dma_semaphore, #tpu.memory_space<semaphore_mem>>
    %56 = tpu.memref_squeeze %55 : memref<1x!tpu.dma_semaphore, #tpu.memory_space<semaphore_mem>> -> memref<!tpu.dma_semaphore, #tpu.memory_space<semaphore_mem>>
    tpu.enqueue_dma source(%53 : memref<1x32xf32, #tpu.memory_space<any>>) target(%54 : memref<1x32xf32, #tpu.memory_space<vmem>>) target_semaphore(%56 : memref<!tpu.dma_semaphore, #tpu.memory_space<semaphore_mem>>)
    %c0_i32_32 = arith.constant 0 : i32
    %c0_i32_33 = arith.constant 0 : i32
    %57 = tpu.memref_slice %arg5[%3, %c0_i32_33] : memref<51x32xf32, #tpu.memory_space<any>> -> memref<1x32xf32, #tpu.memory_space<any>>
    %c0_i32_34 = arith.constant 0 : i32
    %c0_i32_35 = arith.constant 0 : i32
    %58 = tpu.memref_slice %arg7[%c0_i32_34, %c0_i32_35] : memref<8x32xf32, #tpu.memory_space<vmem>> -> memref<1x32xf32, #tpu.memory_space<vmem>>
    %59 = tpu.memref_slice %arg8[%c0_i32_32] : memref<8x!tpu.dma_semaphore, #tpu.memory_space<semaphore_mem>> -> memref<1x!tpu.dma_semaphore, #tpu.memory_space<semaphore_mem>>
    %60 = tpu.memref_squeeze %59 : memref<1x!tpu.dma_semaphore, #tpu.memory_space<semaphore_mem>> -> memref<!tpu.dma_semaphore, #tpu.memory_space<semaphore_mem>>
    tpu.wait_dma2 semaphore(%60 : memref<!tpu.dma_semaphore, #tpu.memory_space<semaphore_mem>>) src(%57 : memref<1x32xf32, #tpu.memory_space<any>>) dst(%58 : memref<1x32xf32, #tpu.memory_space<vmem>>)
    %c1_i32_36 = arith.constant 1 : i32
    %c0_i32_37 = arith.constant 0 : i32
    %61 = tpu.memref_slice %arg5[%10, %c0_i32_37] : memref<51x32xf32, #tpu.memory_space<any>> -> memref<1x32xf32, #tpu.memory_space<any>>
    %c1_i32_38 = arith.constant 1 : i32
    %c0_i32_39 = arith.constant 0 : i32
    %62 = tpu.memref_slice %arg7[%c1_i32_38, %c0_i32_39] : memref<8x32xf32, #tpu.memory_space<vmem>> -> memref<1x32xf32, #tpu.memory_space<vmem>>
    %63 = tpu.memref_slice %arg8[%c1_i32_36] : memref<8x!tpu.dma_semaphore, #tpu.memory_space<semaphore_mem>> -> memref<1x!tpu.dma_semaphore, #tpu.memory_space<semaphore_mem>>
    %64 = tpu.memref_squeeze %63 : memref<1x!tpu.dma_semaphore, #tpu.memory_space<semaphore_mem>> -> memref<!tpu.dma_semaphore, #tpu.memory_space<semaphore_mem>>
    tpu.wait_dma2 semaphore(%64 : memref<!tpu.dma_semaphore, #tpu.memory_space<semaphore_mem>>) src(%61 : memref<1x32xf32, #tpu.memory_space<any>>) dst(%62 : memref<1x32xf32, #tpu.memory_space<vmem>>)
    %c2_i32_40 = arith.constant 2 : i32
    %c0_i32_41 = arith.constant 0 : i32
    %65 = tpu.memref_slice %arg5[%17, %c0_i32_41] : memref<51x32xf32, #tpu.memory_space<any>> -> memref<1x32xf32, #tpu.memory_space<any>>
    %c2_i32_42 = arith.constant 2 : i32
    %c0_i32_43 = arith.constant 0 : i32
    %66 = tpu.memref_slice %arg7[%c2_i32_42, %c0_i32_43] : memref<8x32xf32, #tpu.memory_space<vmem>> -> memref<1x32xf32, #tpu.memory_space<vmem>>
    %67 = tpu.memref_slice %arg8[%c2_i32_40] : memref<8x!tpu.dma_semaphore, #tpu.memory_space<semaphore_mem>> -> memref<1x!tpu.dma_semaphore, #tpu.memory_space<semaphore_mem>>
    %68 = tpu.memref_squeeze %67 : memref<1x!tpu.dma_semaphore, #tpu.memory_space<semaphore_mem>> -> memref<!tpu.dma_semaphore, #tpu.memory_space<semaphore_mem>>
    tpu.wait_dma2 semaphore(%68 : memref<!tpu.dma_semaphore, #tpu.memory_space<semaphore_mem>>) src(%65 : memref<1x32xf32, #tpu.memory_space<any>>) dst(%66 : memref<1x32xf32, #tpu.memory_space<vmem>>)
    %c3_i32_44 = arith.constant 3 : i32
    %c0_i32_45 = arith.constant 0 : i32
    %69 = tpu.memref_slice %arg5[%24, %c0_i32_45] : memref<51x32xf32, #tpu.memory_space<any>> -> memref<1x32xf32, #tpu.memory_space<any>>
    %c3_i32_46 = arith.constant 3 : i32
    %c0_i32_47 = arith.constant 0 : i32
    %70 = tpu.memref_slice %arg7[%c3_i32_46, %c0_i32_47] : memref<8x32xf32, #tpu.memory_space<vmem>> -> memref<1x32xf32, #tpu.memory_space<vmem>>
    %71 = tpu.memref_slice %arg8[%c3_i32_44] : memref<8x!tpu.dma_semaphore, #tpu.memory_space<semaphore_mem>> -> memref<1x!tpu.dma_semaphore, #tpu.memory_space<semaphore_mem>>
    %72 = tpu.memref_squeeze %71 : memref<1x!tpu.dma_semaphore, #tpu.memory_space<semaphore_mem>> -> memref<!tpu.dma_semaphore, #tpu.memory_space<semaphore_mem>>
    tpu.wait_dma2 semaphore(%72 : memref<!tpu.dma_semaphore, #tpu.memory_space<semaphore_mem>>) src(%69 : memref<1x32xf32, #tpu.memory_space<any>>) dst(%70 : memref<1x32xf32, #tpu.memory_space<vmem>>)
    %c4_i32_48 = arith.constant 4 : i32
    %c0_i32_49 = arith.constant 0 : i32
    %73 = tpu.memref_slice %arg5[%31, %c0_i32_49] : memref<51x32xf32, #tpu.memory_space<any>> -> memref<1x32xf32, #tpu.memory_space<any>>
    %c4_i32_50 = arith.constant 4 : i32
    %c0_i32_51 = arith.constant 0 : i32
    %74 = tpu.memref_slice %arg7[%c4_i32_50, %c0_i32_51] : memref<8x32xf32, #tpu.memory_space<vmem>> -> memref<1x32xf32, #tpu.memory_space<vmem>>
    %75 = tpu.memref_slice %arg8[%c4_i32_48] : memref<8x!tpu.dma_semaphore, #tpu.memory_space<semaphore_mem>> -> memref<1x!tpu.dma_semaphore, #tpu.memory_space<semaphore_mem>>
    %76 = tpu.memref_squeeze %75 : memref<1x!tpu.dma_semaphore, #tpu.memory_space<semaphore_mem>> -> memref<!tpu.dma_semaphore, #tpu.memory_space<semaphore_mem>>
    tpu.wait_dma2 semaphore(%76 : memref<!tpu.dma_semaphore, #tpu.memory_space<semaphore_mem>>) src(%73 : memref<1x32xf32, #tpu.memory_space<any>>) dst(%74 : memref<1x32xf32, #tpu.memory_space<vmem>>)
    %c5_i32_52 = arith.constant 5 : i32
    %c0_i32_53 = arith.constant 0 : i32
    %77 = tpu.memref_slice %arg5[%38, %c0_i32_53] : memref<51x32xf32, #tpu.memory_space<any>> -> memref<1x32xf32, #tpu.memory_space<any>>
    %c5_i32_54 = arith.constant 5 : i32
    %c0_i32_55 = arith.constant 0 : i32
    %78 = tpu.memref_slice %arg7[%c5_i32_54, %c0_i32_55] : memref<8x32xf32, #tpu.memory_space<vmem>> -> memref<1x32xf32, #tpu.memory_space<vmem>>
    %79 = tpu.memref_slice %arg8[%c5_i32_52] : memref<8x!tpu.dma_semaphore, #tpu.memory_space<semaphore_mem>> -> memref<1x!tpu.dma_semaphore, #tpu.memory_space<semaphore_mem>>
    %80 = tpu.memref_squeeze %79 : memref<1x!tpu.dma_semaphore, #tpu.memory_space<semaphore_mem>> -> memref<!tpu.dma_semaphore, #tpu.memory_space<semaphore_mem>>
    tpu.wait_dma2 semaphore(%80 : memref<!tpu.dma_semaphore, #tpu.memory_space<semaphore_mem>>) src(%77 : memref<1x32xf32, #tpu.memory_space<any>>) dst(%78 : memref<1x32xf32, #tpu.memory_space<vmem>>)
    %c6_i32_56 = arith.constant 6 : i32
    %c0_i32_57 = arith.constant 0 : i32
    %81 = tpu.memref_slice %arg5[%45, %c0_i32_57] : memref<51x32xf32, #tpu.memory_space<any>> -> memref<1x32xf32, #tpu.memory_space<any>>
    %c6_i32_58 = arith.constant 6 : i32
    %c0_i32_59 = arith.constant 0 : i32
    %82 = tpu.memref_slice %arg7[%c6_i32_58, %c0_i32_59] : memref<8x32xf32, #tpu.memory_space<vmem>> -> memref<1x32xf32, #tpu.memory_space<vmem>>
    %83 = tpu.memref_slice %arg8[%c6_i32_56] : memref<8x!tpu.dma_semaphore, #tpu.memory_space<semaphore_mem>> -> memref<1x!tpu.dma_semaphore, #tpu.memory_space<semaphore_mem>>
    %84 = tpu.memref_squeeze %83 : memref<1x!tpu.dma_semaphore, #tpu.memory_space<semaphore_mem>> -> memref<!tpu.dma_semaphore, #tpu.memory_space<semaphore_mem>>
    tpu.wait_dma2 semaphore(%84 : memref<!tpu.dma_semaphore, #tpu.memory_space<semaphore_mem>>) src(%81 : memref<1x32xf32, #tpu.memory_space<any>>) dst(%82 : memref<1x32xf32, #tpu.memory_space<vmem>>)
    %c7_i32_60 = arith.constant 7 : i32
    %c0_i32_61 = arith.constant 0 : i32
    %85 = tpu.memref_slice %arg5[%52, %c0_i32_61] : memref<51x32xf32, #tpu.memory_space<any>> -> memref<1x32xf32, #tpu.memory_space<any>>
    %c7_i32_62 = arith.constant 7 : i32
    %c0_i32_63 = arith.constant 0 : i32
    %86 = tpu.memref_slice %arg7[%c7_i32_62, %c0_i32_63] : memref<8x32xf32, #tpu.memory_space<vmem>> -> memref<1x32xf32, #tpu.memory_space<vmem>>
    %87 = tpu.memref_slice %arg8[%c7_i32_60] : memref<8x!tpu.dma_semaphore, #tpu.memory_space<semaphore_mem>> -> memref<1x!tpu.dma_semaphore, #tpu.memory_space<semaphore_mem>>
    %88 = tpu.memref_squeeze %87 : memref<1x!tpu.dma_semaphore, #tpu.memory_space<semaphore_mem>> -> memref<!tpu.dma_semaphore, #tpu.memory_space<semaphore_mem>>
    tpu.wait_dma2 semaphore(%88 : memref<!tpu.dma_semaphore, #tpu.memory_space<semaphore_mem>>) src(%85 : memref<1x32xf32, #tpu.memory_space<any>>) dst(%86 : memref<1x32xf32, #tpu.memory_space<vmem>>)
    %c0 = arith.constant 0 : index
    %c0_64 = arith.constant 0 : index
    %89 = vector.load %arg7[%c0, %c0_64] : memref<8x32xf32, #tpu.memory_space<vmem>>, vector<8x32xf32>
    %c0_65 = arith.constant 0 : index
    %c0_66 = arith.constant 0 : index
    %c0_67 = arith.constant 0 : index
    %90 = vector.load %arg2[%c0_65, %c0_66, %c0_67] : memref<1x1x32xf32, #tpu.memory_space<vmem>>, vector<1x1x32xf32>
    %91 = vector.shape_cast %90 : vector<1x1x32xf32> to vector<1x32xf32>
    %cst = arith.constant dense<0.000000e+00> : vector<1x8xf32>
    %92 = tpu.matmul %91, %89, %cst {dimension_numbers = #tpu.dot_dimension_numbers<[1], [1], [0], [0], [0, 0, 1, 0], [], []>} : vector<1x32xf32>, vector<8x32xf32>, vector<1x8xf32> -> vector<1x8xf32>
    %c0_68 = arith.constant 0 : index
    %c0_69 = arith.constant 0 : index
    %c0_70 = arith.constant 0 : index
    %93 = vector.load %arg3[%c0_68, %c0_69, %c0_70] : memref<1x1x8xf32, #tpu.memory_space<vmem>>, vector<1x1x8xf32>
    %94 = vector.shape_cast %93 : vector<1x1x8xf32> to vector<1x8xf32>
    %c0_71 = arith.constant 0 : index
    %c0_72 = arith.constant 0 : index
    %c0_73 = arith.constant 0 : index
    %95 = vector.load %arg4[%c0_71, %c0_72, %c0_73] : memref<1x1x8xf32, #tpu.memory_space<vmem>>, vector<1x1x8xf32>
    %96 = vector.shape_cast %95 : vector<1x1x8xf32> to vector<1x8xf32>
    %cst_74 = arith.constant 0.000000e+00 : f32
    %97 = vector.broadcast %cst_74 : f32 to vector<1x8xf32>
    %98 = arith.maximumf %92, %97 : vector<1x8xf32>
    %99 = arith.mulf %92, %94 : vector<1x8xf32>
    %100 = arith.subf %98, %99 : vector<1x8xf32>
    %101 = math.absf %92 : vector<1x8xf32>
    %cst_75 = arith.constant 0.000000e+00 : f32
    %102 = vector.broadcast %cst_75 : f32 to vector<1x8xf32>
    %103 = arith.subf %102, %101 : vector<1x8xf32>
    %104 = math.exp %103 : vector<1x8xf32>
    %105 = math.log1p %104 : vector<1x8xf32>
    %106 = arith.addf %100, %105 : vector<1x8xf32>
    %107 = arith.mulf %106, %96 : vector<1x8xf32>
    %108 = vector.shape_cast %107 : vector<1x8xf32> to vector<1x1x8xf32>
    %cst_76 = arith.constant dense<0.000000e+00> : vector<1xf32>
    %109 = vector.multi_reduction <add>, %108, %cst_76 [1, 2] : vector<1x1x8xf32> to vector<1xf32>
    %110 = vector.shape_cast %109 : vector<1xf32> to vector<1x1x1xf32>
    %111 = vector.extract %110[0, 0, 0] : f32 from vector<1x1x1xf32>
    %112 = arith.mulf %91, %91 : vector<1x32xf32>
    %113 = vector.shape_cast %112 : vector<1x32xf32> to vector<1x1x32xf32>
    %cst_77 = arith.constant dense<0.000000e+00> : vector<1xf32>
    %114 = vector.multi_reduction <add>, %113, %cst_77 [1, 2] : vector<1x1x32xf32> to vector<1xf32>
    %115 = vector.shape_cast %114 : vector<1xf32> to vector<1x1x1xf32>
    %116 = vector.extract %115[0, 0, 0] : f32 from vector<1x1x1xf32>
    %117 = arith.mulf %89, %89 : vector<8x32xf32>
    %118 = vector.shape_cast %117 : vector<8x32xf32> to vector<1x8x32xf32>
    %cst_78 = arith.constant dense<0.000000e+00> : vector<1xf32>
    %119 = vector.multi_reduction <add>, %118, %cst_78 [1, 2] : vector<1x8x32xf32> to vector<1xf32>
    %120 = vector.shape_cast %119 : vector<1xf32> to vector<1x1x1xf32>
    %121 = vector.extract %120[0, 0, 0] : f32 from vector<1x1x1xf32>
    %122 = tpu.iota {dimensions = array<i32: 1>} : vector<1x128xi32>
    %c0_i32_79 = arith.constant 0 : i32
    %123 = vector.broadcast %c0_i32_79 : i32 to vector<1x128xi32>
    %124 = arith.cmpi eq, %122, %123 : vector<1x128xi32>
    %c1_i32_80 = arith.constant 1 : i32
    %125 = vector.broadcast %c1_i32_80 : i32 to vector<1x128xi32>
    %126 = arith.cmpi eq, %122, %125 : vector<1x128xi32>
    %c2_i32_81 = arith.constant 2 : i32
    %127 = vector.broadcast %c2_i32_81 : i32 to vector<1x128xi32>
    %128 = arith.cmpi eq, %122, %127 : vector<1x128xi32>
    %cst_82 = arith.constant 0.000000e+00 : f32
    %129 = vector.broadcast %121 : f32 to vector<1x128xf32>
    %130 = vector.broadcast %cst_82 : f32 to vector<1x128xf32>
    %131 = arith.select %128, %129, %130 : vector<1x128xi1>, vector<1x128xf32>
    %132 = vector.broadcast %116 : f32 to vector<1x128xf32>
    %133 = arith.select %126, %132, %131 : vector<1x128xi1>, vector<1x128xf32>
    %134 = vector.broadcast %111 : f32 to vector<1x128xf32>
    %135 = arith.select %124, %134, %133 : vector<1x128xi1>, vector<1x128xf32>
    %c0_83 = arith.constant 0 : index
    %c0_84 = arith.constant 0 : index
    %c0_85 = arith.constant 0 : index
    %136 = vector.load %arg6[%c0_83, %c0_84, %c0_85] : memref<1x1x128xf32, #tpu.memory_space<vmem>>, vector<1x1x128xf32>
    %137 = vector.shape_cast %136 : vector<1x1x128xf32> to vector<1x128xf32>
    %138 = vector.shape_cast %135 : vector<1x128xf32> to vector<1x1x128xf32>
    tpu.vector_store %arg6[%c0_83, %c0_84, %c0_85], %138 {strides = array<i32>} : memref<1x1x128xf32, #tpu.memory_space<vmem>>, vector<1x1x128xf32>,
    return
  }
  func.func @transform_0(%arg0: i32, %arg1: memref<16xi32, #tpu.memory_space<smem>>) -> (i32, i32, i32) {
    %c0_i32 = arith.constant 0 : i32
    %c0_i32_0 = arith.constant 0 : i32
    %c0_i32_1 = arith.constant 0 : i32
    return %arg0, %c0_i32, %c0_i32_0 : i32, i32, i32
  }
  func.func @transform_1(%arg0: i32, %arg1: memref<16xi32, #tpu.memory_space<smem>>) -> (i32, i32, i32) {
    %c0_i32 = arith.constant 0 : i32
    %c0_i32_0 = arith.constant 0 : i32
    %c0_i32_1 = arith.constant 0 : i32
    return %arg0, %c0_i32, %c0_i32_0 : i32, i32, i32
  }
  func.func @transform_2(%arg0: i32, %arg1: memref<16xi32, #tpu.memory_space<smem>>) -> (i32, i32, i32) {
    %c0_i32 = arith.constant 0 : i32
    %c0_i32_0 = arith.constant 0 : i32
    %c0_i32_1 = arith.constant 0 : i32
    return %arg0, %c0_i32, %c0_i32_0 : i32, i32, i32
  }
  func.func @transform_4(%arg0: i32, %arg1: memref<16xi32, #tpu.memory_space<smem>>) -> (i32, i32, i32) {
    %c0_i32 = arith.constant 0 : i32
    %c0_i32_0 = arith.constant 0 : i32
    %c0_i32_1 = arith.constant 0 : i32
    return %arg0, %c0_i32, %c0_i32_0 : i32, i32, i32
  }
}

</mosaic_0001>

<llo_original>
// kernel: tpu_custom_call.1
$region0: #{tpu_custom_call.1}
  #allocation0 [shape = 'u32[]', space=smem, size = 0x4, offset = 0x4, fixed_abs, tag = 'smem constant byte address 0x4 - core index']
  #allocation1 [shape = 'u32[144,128]{1,0:T(1,128)}', space=vmem, size = 0x12000, scoped, tag = 'internal scratch']
  #allocation2 [shape = 'f32[8,32]{1,0:T(8,128)}', space=vmem, size = 0x1000, scoped, tag = 'scratch operand']
  #allocation3 [shape = 's32[8]{0}', space=sflag, size = 0x20, scoped, tag = 'scratch operand']
  #allocation4 [shape = 's32[1]{0}', space=sflag, size = 0x4, scoped, tag = 'scoped memory for tpu_custom_call.1']
  #allocation5 [shape = 'u8[512]{0}', space=smem, size = 0x200, scoped, tag = 'prefetched SMEM operand 0']
  #allocation8 [shape = 's32[]', space=sflag, size = 0x4, offset = 0, fixed_abs, tag = 'sflag constant byte address 0x0 - dummy sync flag']
  #allocation9 [shape = 's32[]', space=sflag, size = 0x4, offset = 0, fixed_abs, tag = 'sflag constant byte address 0x0 - dummy sync flag']
  #allocation10 [shape = 's32[]', space=sflag, size = 0x4, offset = 0, fixed_abs, tag = 'sflag constant byte address 0x0 - dummy sync flag']
  #allocation11 [shape = 's32[]', space=sflag, size = 0x4, offset = 0, fixed_abs, tag = 'sflag constant byte address 0x0 - dummy sync flag']
  #allocation12 [shape = 's32[]', space=sflag, size = 0x4, offset = 0, fixed_abs, tag = 'sflag constant byte address 0x0 - dummy sync flag']
  #allocation13 [shape = 's32[]', space=sflag, size = 0x4, offset = 0, fixed_abs, tag = 'sflag constant byte address 0x0 - dummy sync flag']
  #allocation14 [shape = 's32[]', space=sflag, size = 0x4, offset = 0, fixed_abs, tag = 'sflag constant byte address 0x0 - dummy sync flag']
  #allocation15 [shape = 's32[]', space=sflag, size = 0x4, offset = 0, fixed_abs, tag = 'sflag constant byte address 0x0 - dummy sync flag']
  %s0 = inlined_call_operand.vmem [shape: s32[16], index: 0, kind: input, shape index: {}]
  %s1 = inlined_call_operand.vmem [shape: f32[2,1,32], index: 1, kind: input, shape index: {}]
  %s2 = inlined_call_operand.vmem [shape: f32[2,1,8], index: 2, kind: input, shape index: {}]
  %s3 = inlined_call_operand.vmem [shape: f32[2,1,8], index: 3, kind: input, shape index: {}]
  %s4 = inlined_call_operand.vmem [shape: f32[51,32], index: 4, kind: input, shape index: {}]
  %s5 = inlined_call_operand.hbm [shape: f32[2,1,128], index: 5, kind: output, shape index: {}]
  %s6 = sld [smem:[#allocation0]]
  $region285: #{tpu_custom_call.1} parent=0
    _
  %s8 = ssub.s32 1, %s6
  %s9 = scalar_select 0, %s8, %s6
  %s10 = sshll.u32 %s0, 4
  %s11 = int_to_ptr.vmem [resolvable:$true] %s10
  %13 = dma.vmem_to_smem %s11, 16, [#allocation5], [#allocation4]
  %14 = dma.done [#allocation4], 16
  %15 = sfence
  $region1: #{tpu_custom_call.1} parent=0
    #allocation6 [shape = 'u8[1024]{0}', space=vmem, size = 0x400, scoped, tag = 'output window, operand 0']
    #allocation7 [shape = 's32[2]{0}', space=sflag, size = 0x8, scoped, tag = 'scoped memory for tpu_custom_call.1']
    %16 = vsyncpa [#allocation7], 0
    %s17 = scalar_lea.sflag [#allocation7], 1
    %18 = vsyncpa %s17, 0
    loop: start=0, step=1, limit=4
    $region2: #{tpu_custom_call.1} parent=1 // loop_pre_header
      _
    $region3: #{tpu_custom_call.1} parent=1 // loop_header
      %s20 = sphi 0, %s24
      %p21 = scmp.ge.s32.totalorder %s20, 4
      %s30 = sphi 0, %s32
      %s33 = sphi 0, %s30
      %s34 = sphi 0, %s33
      %s50 = sphi 0, %s34
      %s56 = sphi 0, %s58
      %s59 = sphi 0, %s56
      %s60 = sphi 0, %s59
      %s76 = sphi 0, %s60
      %s82 = sphi 0, %s84
      %s85 = sphi 0, %s82
      %s86 = sphi 0, %s85
      %s102 = sphi 0, %s86
      %s108 = sphi 0, %s110
      %s111 = sphi 0, %s108
      %s112 = sphi 0, %s111
      %s128 = sphi 0, %s112
    $region4: #{tpu_custom_call.1} parent=1 // loop_header_branch
      %23 = sbr.rel (%p21) target = $region8
    $region5: #{tpu_custom_call.1} parent=1 // loop_body
      %s25 = ssub.s32 %s20, 1
      %s26 = ssub.s32 %s20, 2
      %s27 = sadd.s32 %s20, 1
      %s28 = ssub.s32 %s20, %s27
      %p29 = scmp.eq.s32.totalorder %s28, 0
      %s31 = sadd.s32 %s30, 1
      %s32 = scalar_select %p29, %s30, %s31
      %p35 = pneg %p29
      %p36 = scmp.eq.s32.totalorder %s20, 1
      %p37 = por %p35, %p36
      %p38 = scmp.ne.s32.totalorder %s30, %s33
      %p39 = scmp.eq.s32.totalorder %s20, 0
      %p40 = por %p38, %p39
      %p41 = scmp.ne.s32.totalorder %s30, %s33
      %p42 = scmp.eq.s32.totalorder %s25, 1
      %p43 = por %p41, %p42
      %p44 = scmp.ne.s32.totalorder %s33, %s34
      %p45 = scmp.eq.s32.totalorder %s25, 0
      %p46 = por %p44, %p45
      %p47 = scmp.ne.s32.totalorder %s33, %s34
      %p48 = scmp.eq.s32.totalorder %s26, 1
      %p49 = por %p47, %p48
      %p51 = scmp.ne.s32.totalorder %s34, %s50
      %p52 = scmp.eq.s32.totalorder %s26, 0
      %p53 = por %p51, %p52
      %s54 = ssub.s32 %s20, %s27
      %p55 = scmp.eq.s32.totalorder %s54, 0
      %s57 = sadd.s32 %s56, 1
      %s58 = scalar_select %p55, %s56, %s57
      %p61 = pneg %p55
      %p62 = scmp.eq.s32.totalorder %s20, 1
      %p63 = por %p61, %p62
      %p64 = scmp.ne.s32.totalorder %s56, %s59
      %p65 = scmp.eq.s32.totalorder %s20, 0
      %p66 = por %p64, %p65
      %p67 = scmp.ne.s32.totalorder %s56, %s59
      %p68 = scmp.eq.s32.totalorder %s25, 1
      %p69 = por %p67, %p68
      %p70 = scmp.ne.s32.totalorder %s59, %s60
      %p71 = scmp.eq.s32.totalorder %s25, 0
      %p72 = por %p70, %p71
      %p73 = scmp.ne.s32.totalorder %s59, %s60
      %p74 = scmp.eq.s32.totalorder %s26, 1
      %p75 = por %p73, %p74
      %p77 = scmp.ne.s32.totalorder %s60, %s76
      %p78 = scmp.eq.s32.totalorder %s26, 0
      %p79 = por %p77, %p78
      %s80 = ssub.s32 %s20, %s27
      %p81 = scmp.eq.s32.totalorder %s80, 0
      %s83 = sadd.s32 %s82, 1
      %s84 = scalar_select %p81, %s82, %s83
      %p87 = pneg %p81
      %p88 = scmp.eq.s32.totalorder %s20, 1
      %p89 = por %p87, %p88
      %p90 = scmp.ne.s32.totalorder %s82, %s85
      %p91 = scmp.eq.s32.totalorder %s20, 0
      %p92 = por %p90, %p91
      %p93 = scmp.ne.s32.totalorder %s82, %s85
      %p94 = scmp.eq.s32.totalorder %s25, 1
      %p95 = por %p93, %p94
      %p96 = scmp.ne.s32.totalorder %s85, %s86
      %p97 = scmp.eq.s32.totalorder %s25, 0
      %p98 = por %p96, %p97
      %p99 = scmp.ne.s32.totalorder %s85, %s86
      %p100 = scmp.eq.s32.totalorder %s26, 1
      %p101 = por %p99, %p100
      %p103 = scmp.ne.s32.totalorder %s86, %s102
      %p104 = scmp.eq.s32.totalorder %s26, 0
      %p105 = por %p103, %p104
      %s106 = ssub.s32 %s20, %s27
      %p107 = scmp.eq.s32.totalorder %s106, 0
      %s109 = sadd.s32 %s108, 1
      %s110 = scalar_select %p107, %s108, %s109
      %p113 = pneg %p107
      %p114 = scmp.eq.s32.totalorder %s20, 1
      %p115 = por %p113, %p114
      %p116 = scmp.ne.s32.totalorder %s108, %s111
      %p117 = scmp.eq.s32.totalorder %s20, 0
      %p118 = por %p116, %p117
      %p119 = scmp.ne.s32.totalorder %s108, %s111
      %p120 = scmp.eq.s32.totalorder %s25, 1
      %p121 = por %p119, %p120
      %p122 = scmp.ne.s32.totalorder %s111, %s112
      %p123 = scmp.eq.s32.totalorder %s25, 0
      %p124 = por %p122, %p123
      %p125 = scmp.ne.s32.totalorder %s111, %s112
      %p126 = scmp.eq.s32.totalorder %s26, 1
      %p127 = por %p125, %p126
      %p129 = scmp.ne.s32.totalorder %s112, %s128
      %p130 = scmp.eq.s32.totalorder %s26, 0
      %p131 = por %p129, %p130
      %p132 = scmp.le.s32.totalorder 1, %s20
      %p133 = scmp.lt.s32.totalorder %s20, 3
      %p134 = pnand %p132, %p133
      %p135 = pneg %p134
      // Predicated region
      $region9: #{tpu_custom_call.1} parent=5 // pred_check
        _
      $region10: #{tpu_custom_call.1} parent=5 // pred_check_branch
        %137 = sbr.rel (%p134) target = $region12
      $region11: #{tpu_custom_call.1} parent=5 // pred_region
        %s138 = ssub.s32 %s20, 1
      $region12: #{tpu_custom_call.1} parent=5 // pred_fallthru
        _
      %p139 = scmp.lt.s32.totalorder %s20, 2
      // Predicated region
      $region13: #{tpu_custom_call.1} parent=5 // pred_check
        %p140 = pneg %p139
      $region14: #{tpu_custom_call.1} parent=5 // pred_check_branch
        %142 = sbr.rel (%p140) target = $region16
      $region15: #{tpu_custom_call.1} parent=5 // pred_region
        // Predicated region
        $region17: #{tpu_custom_call.1} parent=15 // pred_check
          %p143 = pneg %p40
        $region18: #{tpu_custom_call.1} parent=15 // pred_check_branch
          %145 = sbr.rel (%p143) target = $region20
        $region19: #{tpu_custom_call.1} parent=15 // pred_region
          %p146 = scmp.lt.s32.totalorder %s20, 1
          %s147 = scalar_select %p146, %s20, 1
          %s148 = scalar_lea.vmem %s1, %s147
        $region20: #{tpu_custom_call.1} parent=15 // pred_fallthru
          _
        // Predicated region
        $region21: #{tpu_custom_call.1} parent=15 // pred_check
          %p149 = pneg %p66
        $region22: #{tpu_custom_call.1} parent=15 // pred_check_branch
          %151 = sbr.rel (%p149) target = $region24
        $region23: #{tpu_custom_call.1} parent=15 // pred_region
          %p152 = scmp.lt.s32.totalorder %s20, 1
          %s153 = scalar_select %p152, %s20, 1
          %s154 = scalar_lea.vmem %s2, %s153
        $region24: #{tpu_custom_call.1} parent=15 // pred_fallthru
          _
        // Predicated region
        $region25: #{tpu_custom_call.1} parent=15 // pred_check
          %p155 = pneg %p92
        $region26: #{tpu_custom_call.1} parent=15 // pred_check_branch
          %157 = sbr.rel (%p155) target = $region28
        $region27: #{tpu_custom_call.1} parent=15 // pred_region
          %p158 = scmp.lt.s32.totalorder %s20, 1
          %s159 = scalar_select %p158, %s20, 1
          %s160 = scalar_lea.vmem %s3, %s159
        $region28: #{tpu_custom_call.1} parent=15 // pred_fallthru
          _
      $region16: #{tpu_custom_call.1} parent=5 // pred_fallthru
        _
      %p161 = scmp.le.s32.totalorder 1, %s20
      %p162 = scmp.lt.s32.totalorder %s20, 3
      %p163 = pnand %p161, %p162
      %p164 = pneg %p163
      // Predicated region
      $region29: #{tpu_custom_call.1} parent=5 // pred_check
        _
      $region30: #{tpu_custom_call.1} parent=5 // pred_check_branch
        %166 = sbr.rel (%p163) target = $region32
      $region31: #{tpu_custom_call.1} parent=5 // pred_region
        %s167 = ssub.s32 %s20, 1
        %p168 = scmp.lt.s32.totalorder %s25, 1
        %s169 = scalar_select %p168, %s25, 1
        %s170 = scalar_lea.vmem %s1, %s169
        %p171 = pneg %p46
        %p172 = pneg %p43
        %p173 = scmp.lt.s32.totalorder %s25, 1
        %s174 = scalar_select %p173, %s25, 1
        %s175 = scalar_lea.vmem %s2, %s174
        %p176 = pneg %p72
        %p177 = pneg %p69
        %p178 = scmp.lt.s32.totalorder %s25, 1
        %s179 = scalar_select %p178, %s25, 1
        %s180 = scalar_lea.vmem %s3, %s179
        %p181 = pneg %p98
        %p182 = pneg %p95
        %p183 = pneg %p124
        %p184 = pneg %p121
        %s185 = sand.u32 %s111, 1
        %s186 = scalar_lea.sflag [#allocation7], %s185
        %s187 = sand.u32 %s111, 1
        %s188 = scalar_lea.vmem [#allocation6], %s187
        %p189 = scmp.lt.s32.totalorder %s25, 1
        %s190 = scalar_select %p189, %s25, 1
        %s191 = scalar_lea.vmem %s1, %s190
        %p192 = scmp.lt.s32.totalorder %s25, 1
        %s193 = scalar_select %p192, %s25, 1
        %s194 = scalar_lea.vmem %s2, %s193
        %p195 = scmp.lt.s32.totalorder %s25, 1
        %s196 = scalar_select %p195, %s25, 1
        %s197 = scalar_lea.vmem %s3, %s196
        %s198 = smul.u32 %s25, 8
        %s199 = sld [smem:[#allocation5 + %s198]]
        %s200 = scalar_lea.vmem %s4, %s199
        %p202 = scmp.lt.u32.totalorder 1, 8
        %p203 = pneg %p202
        // Predicated region
        $region33: #{tpu_custom_call.1} parent=31 // pred_check
          _
        $region34: #{tpu_custom_call.1} parent=31 // pred_check_branch
          %205 = sbr.rel (%p202) target = $region36
        $region35: #{tpu_custom_call.1} parent=31 // pred_region
          %s220 = sand.u32 1, 7
          %p221 = scmp.eq.s32.totalorder %s220, 0
          %p222 = pneg %p221
          // Predicated region
          $region48: #{tpu_custom_call.1} parent=35 // pred_check
            _
          $region49: #{tpu_custom_call.1} parent=35 // pred_check_branch
            %224 = sbr.rel (%p221) target = $region51
          $region50: #{tpu_custom_call.1} parent=35 // pred_region
            %s225 = sand.u32 1, 7
            %s226 = ssub.s32 1, %s225
            %s227 = scalar_lea.vmem %s200, %s226
            %s228 = ssub.s32 1, %s225
            %s229 = scalar_lea.vmem [#allocation2], %s228
            %s230 = sshllo.u32 0, %s225
            loop: start=0, step=1, limit=1
            $region52: #{tpu_custom_call.1} parent=50 // loop_pre_header
              _
            $region53: #{tpu_custom_call.1} parent=50 // loop_header
              %s232 = sphi 0, %s236
              %p233 = scmp.ge.s32.totalorder %s232, 1
              %s237 = sphi %s227, %s227
              %s238 = sphi %s229, %s229
            $region54: #{tpu_custom_call.1} parent=50 // loop_header_branch
              %235 = sbr.rel (%p233) target = $region58
            $region55: #{tpu_custom_call.1} parent=50 // loop_body
              %v239 = vld [vmem:[%s237] sm:%s230]
              %240 = vst [vmem:[%s238] sm:%s230] %v239
            $region56: #{tpu_custom_call.1} parent=50 // loop_footer
              %s236 = sadd.s32 1, %s232
            $region57: #{tpu_custom_call.1} parent=50 // loop_footer_branch
              %231 = sbr.rel target = $region53
            $region58: #{tpu_custom_call.1} parent=50 // loop_exit
              _
          $region51: #{tpu_custom_call.1} parent=35 // pred_fallthru
            _
        $region36: #{tpu_custom_call.1} parent=31 // pred_fallthru
          _
        // Predicated region
        $region37: #{tpu_custom_call.1} parent=31 // pred_check
          %p206 = pneg %p202
        $region38: #{tpu_custom_call.1} parent=31 // pred_check_branch
          %208 = sbr.rel (%p206) target = $region40
        $region39: #{tpu_custom_call.1} parent=31 // pred_region
          %s209 = sshllo.u32 0, 1
          loop: start=0, step=1, limit=1
          $region41: #{tpu_custom_call.1} parent=39 // loop_pre_header
            _
          $region42: #{tpu_custom_call.1} parent=39 // loop_header
            %s211 = sphi 0, %s215
            %p212 = scmp.ge.s32.totalorder %s211, 1
            %s216 = sphi %s200, %s200
            %s217 = sphi [#allocation2], [#allocation2]
          $region43: #{tpu_custom_call.1} parent=39 // loop_header_branch
            %214 = sbr.rel (%p212) target = $region47
          $region44: #{tpu_custom_call.1} parent=39 // loop_body
            %v218 = vld [vmem:[%s216] sm:%s209]
            %219 = vst [vmem:[%s217] sm:%s209] %v218
          $region45: #{tpu_custom_call.1} parent=39 // loop_footer
            %s215 = sadd.s32 1, %s211
          $region46: #{tpu_custom_call.1} parent=39 // loop_footer_branch
            %210 = sbr.rel target = $region42
          $region47: #{tpu_custom_call.1} parent=39 // loop_exit
            _
        $region40: #{tpu_custom_call.1} parent=31 // pred_fallthru
          _
        // Predicated region
        $region59: #{tpu_custom_call.1} parent=31 // pred_check
          _
        $region60: #{tpu_custom_call.1} parent=31 // pred_check_branch
          %243 = sbr.rel (0) target = $region62
        $region61: #{tpu_custom_call.1} parent=31 // pred_region
          %244 = vsyncadd [#allocation3], 16
        $region62: #{tpu_custom_call.1} parent=31 // pred_fallthru
          _
        %s245 = sadd.s32 %s198, 1
        %s246 = sld [smem:[#allocation5 + %s245]]
        %s247 = scalar_lea.vmem %s4, %s246
        %s248 = scalar_lea.vmem [#allocation2], 1
        %s249 = scalar_lea.sflag [#allocation3], 1
        %p251 = scmp.lt.u32.totalorder 1, 8
        %p252 = pneg %p251
        // Predicated region
        $region63: #{tpu_custom_call.1} parent=31 // pred_check
          _
        $region64: #{tpu_custom_call.1} parent=31 // pred_check_branch
          %254 = sbr.rel (%p251) target = $region66
        $region65: #{tpu_custom_call.1} parent=31 // pred_region
          %s269 = sand.u32 1, 7
          %p270 = scmp.eq.s32.totalorder %s269, 0
          %p271 = pneg %p270
          // Predicated region
          $region78: #{tpu_custom_call.1} parent=65 // pred_check
            _
          $region79: #{tpu_custom_call.1} parent=65 // pred_check_branch
            %273 = sbr.rel (%p270) target = $region81
          $region80: #{tpu_custom_call.1} parent=65 // pred_region
            %s274 = sand.u32 1, 7
            %s275 = ssub.s32 1, %s274
            %s276 = scalar_lea.vmem %s247, %s275
            %s277 = ssub.s32 1, %s274
            %s278 = scalar_lea.vmem %s248, %s277 [#allocation2]
            %s279 = sshllo.u32 0, %s274
            loop: start=0, step=1, limit=1
            $region82: #{tpu_custom_call.1} parent=80 // loop_pre_header
              _
            $region83: #{tpu_custom_call.1} parent=80 // loop_header
              %s281 = sphi 0, %s285
              %p282 = scmp.ge.s32.totalorder %s281, 1
              %s286 = sphi %s276, %s276
              %s287 = sphi %s278, %s278
            $region84: #{tpu_custom_call.1} parent=80 // loop_header_branch
              %284 = sbr.rel (%p282) target = $region88
            $region85: #{tpu_custom_call.1} parent=80 // loop_body
              %v288 = vld [vmem:[%s286] sm:%s279]
              %289 = vst [vmem:[%s287] sm:%s279] %v288
            $region86: #{tpu_custom_call.1} parent=80 // loop_footer
              %s285 = sadd.s32 1, %s281
            $region87: #{tpu_custom_call.1} parent=80 // loop_footer_branch
              %280 = sbr.rel target = $region83
            $region88: #{tpu_custom_call.1} parent=80 // loop_exit
              _
          $region81: #{tpu_custom_call.1} parent=65 // pred_fallthru
            _
        $region66: #{tpu_custom_call.1} parent=31 // pred_fallthru
          _
        // Predicated region
        $region67: #{tpu_custom_call.1} parent=31 // pred_check
          %p255 = pneg %p251
        $region68: #{tpu_custom_call.1} parent=31 // pred_check_branch
          %257 = sbr.rel (%p255) target = $region70
        $region69: #{tpu_custom_call.1} parent=31 // pred_region
          %s258 = sshllo.u32 0, 1
          loop: start=0, step=1, limit=1
          $region71: #{tpu_custom_call.1} parent=69 // loop_pre_header
            _
          $region72: #{tpu_custom_call.1} parent=69 // loop_header
            %s260 = sphi 0, %s264
            %p261 = scmp.ge.s32.totalorder %s260, 1
            %s265 = sphi %s247, %s247
            %s266 = sphi %s248, %s248
          $region73: #{tpu_custom_call.1} parent=69 // loop_header_branch
            %263 = sbr.rel (%p261) target = $region77
          $region74: #{tpu_custom_call.1} parent=69 // loop_body
            %v267 = vld [vmem:[%s265] sm:%s258]
            %268 = vst [vmem:[%s266] sm:%s258] %v267
          $region75: #{tpu_custom_call.1} parent=69 // loop_footer
            %s264 = sadd.s32 1, %s260
          $region76: #{tpu_custom_call.1} parent=69 // loop_footer_branch
            %259 = sbr.rel target = $region72
          $region77: #{tpu_custom_call.1} parent=69 // loop_exit
            _
        $region70: #{tpu_custom_call.1} parent=31 // pred_fallthru
          _
        // Predicated region
        $region89: #{tpu_custom_call.1} parent=31 // pred_check
          _
        $region90: #{tpu_custom_call.1} parent=31 // pred_check_branch
          %292 = sbr.rel (0) target = $region92
        $region91: #{tpu_custom_call.1} parent=31 // pred_region
          %293 = vsyncadd %s249, 16
        $region92: #{tpu_custom_call.1} parent=31 // pred_fallthru
          _
        %s294 = sadd.s32 %s198, 2
        %s295 = sld [smem:[#allocation5 + %s294]]
        %s296 = scalar_lea.vmem %s4, %s295
        %s297 = scalar_lea.vmem [#allocation2], 2
        %s298 = scalar_lea.sflag [#allocation3], 2
        %p300 = scmp.lt.u32.totalorder 1, 8
        %p301 = pneg %p300
        // Predicated region
        $region93: #{tpu_custom_call.1} parent=31 // pred_check
          _
        $region94: #{tpu_custom_call.1} parent=31 // pred_check_branch
          %303 = sbr.rel (%p300) target = $region96
        $region95: #{tpu_custom_call.1} parent=31 // pred_region
          %s318 = sand.u32 1, 7
          %p319 = scmp.eq.s32.totalorder %s318, 0
          %p320 = pneg %p319
          // Predicated region
          $region108: #{tpu_custom_call.1} parent=95 // pred_check
            _
          $region109: #{tpu_custom_call.1} parent=95 // pred_check_branch
            %322 = sbr.rel (%p319) target = $region111
          $region110: #{tpu_custom_call.1} parent=95 // pred_region
            %s323 = sand.u32 1, 7
            %s324 = ssub.s32 1, %s323
            %s325 = scalar_lea.vmem %s296, %s324
            %s326 = ssub.s32 1, %s323
            %s327 = scalar_lea.vmem %s297, %s326 [#allocation2]
            %s328 = sshllo.u32 0, %s323
            loop: start=0, step=1, limit=1
            $region112: #{tpu_custom_call.1} parent=110 // loop_pre_header
              _
            $region113: #{tpu_custom_call.1} parent=110 // loop_header
              %s330 = sphi 0, %s334
              %p331 = scmp.ge.s32.totalorder %s330, 1
              %s335 = sphi %s325, %s325
              %s336 = sphi %s327, %s327
            $region114: #{tpu_custom_call.1} parent=110 // loop_header_branch
              %333 = sbr.rel (%p331) target = $region118
            $region115: #{tpu_custom_call.1} parent=110 // loop_body
              %v337 = vld [vmem:[%s335] sm:%s328]
              %338 = vst [vmem:[%s336] sm:%s328] %v337
            $region116: #{tpu_custom_call.1} parent=110 // loop_footer
              %s334 = sadd.s32 1, %s330
            $region117: #{tpu_custom_call.1} parent=110 // loop_footer_branch
              %329 = sbr.rel target = $region113
            $region118: #{tpu_custom_call.1} parent=110 // loop_exit
              _
          $region111: #{tpu_custom_call.1} parent=95 // pred_fallthru
            _
        $region96: #{tpu_custom_call.1} parent=31 // pred_fallthru
          _
        // Predicated region
        $region97: #{tpu_custom_call.1} parent=31 // pred_check
          %p304 = pneg %p300
        $region98: #{tpu_custom_call.1} parent=31 // pred_check_branch
          %306 = sbr.rel (%p304) target = $region100
        $region99: #{tpu_custom_call.1} parent=31 // pred_region
          %s307 = sshllo.u32 0, 1
          loop: start=0, step=1, limit=1
          $region101: #{tpu_custom_call.1} parent=99 // loop_pre_header
            _
          $region102: #{tpu_custom_call.1} parent=99 // loop_header
            %s309 = sphi 0, %s313
            %p310 = scmp.ge.s32.totalorder %s309, 1
            %s314 = sphi %s296, %s296
            %s315 = sphi %s297, %s297
          $region103: #{tpu_custom_call.1} parent=99 // loop_header_branch
            %312 = sbr.rel (%p310) target = $region107
          $region104: #{tpu_custom_call.1} parent=99 // loop_body
            %v316 = vld [vmem:[%s314] sm:%s307]
            %317 = vst [vmem:[%s315] sm:%s307] %v316
          $region105: #{tpu_custom_call.1} parent=99 // loop_footer
            %s313 = sadd.s32 1, %s309
          $region106: #{tpu_custom_call.1} parent=99 // loop_footer_branch
            %308 = sbr.rel target = $region102
          $region107: #{tpu_custom_call.1} parent=99 // loop_exit
            _
        $region100: #{tpu_custom_call.1} parent=31 // pred_fallthru
          _
        // Predicated region
        $region119: #{tpu_custom_call.1} parent=31 // pred_check
          _
        $region120: #{tpu_custom_call.1} parent=31 // pred_check_branch
          %341 = sbr.rel (0) target = $region122
        $region121: #{tpu_custom_call.1} parent=31 // pred_region
          %342 = vsyncadd %s298, 16
        $region122: #{tpu_custom_call.1} parent=31 // pred_fallthru
          _
        %s343 = sadd.s32 %s198, 3
        %s344 = sld [smem:[#allocation5 + %s343]]
        %s345 = scalar_lea.vmem %s4, %s344
        %s346 = scalar_lea.vmem [#allocation2], 3
        %s347 = scalar_lea.sflag [#allocation3], 3
        %p349 = scmp.lt.u32.totalorder 1, 8
        %p350 = pneg %p349
        // Predicated region
        $region123: #{tpu_custom_call.1} parent=31 // pred_check
          _
        $region124: #{tpu_custom_call.1} parent=31 // pred_check_branch
          %352 = sbr.rel (%p349) target = $region126
        $region125: #{tpu_custom_call.1} parent=31 // pred_region
          %s367 = sand.u32 1, 7
          %p368 = scmp.eq.s32.totalorder %s367, 0
          %p369 = pneg %p368
          // Predicated region
          $region138: #{tpu_custom_call.1} parent=125 // pred_check
            _
          $region139: #{tpu_custom_call.1} parent=125 // pred_check_branch
            %371 = sbr.rel (%p368) target = $region141
          $region140: #{tpu_custom_call.1} parent=125 // pred_region
            %s372 = sand.u32 1, 7
            %s373 = ssub.s32 1, %s372
            %s374 = scalar_lea.vmem %s345, %s373
            %s375 = ssub.s32 1, %s372
            %s376 = scalar_lea.vmem %s346, %s375 [#allocation2]
            %s377 = sshllo.u32 0, %s372
            loop: start=0, step=1, limit=1
            $region142: #{tpu_custom_call.1} parent=140 // loop_pre_header
              _
            $region143: #{tpu_custom_call.1} parent=140 // loop_header
              %s379 = sphi 0, %s383
              %p380 = scmp.ge.s32.totalorder %s379, 1
              %s384 = sphi %s374, %s374
              %s385 = sphi %s376, %s376
            $region144: #{tpu_custom_call.1} parent=140 // loop_header_branch
              %382 = sbr.rel (%p380) target = $region148
            $region145: #{tpu_custom_call.1} parent=140 // loop_body
              %v386 = vld [vmem:[%s384] sm:%s377]
              %387 = vst [vmem:[%s385] sm:%s377] %v386
            $region146: #{tpu_custom_call.1} parent=140 // loop_footer
              %s383 = sadd.s32 1, %s379
            $region147: #{tpu_custom_call.1} parent=140 // loop_footer_branch
              %378 = sbr.rel target = $region143
            $region148: #{tpu_custom_call.1} parent=140 // loop_exit
              _
          $region141: #{tpu_custom_call.1} parent=125 // pred_fallthru
            _
        $region126: #{tpu_custom_call.1} parent=31 // pred_fallthru
          _
        // Predicated region
        $region127: #{tpu_custom_call.1} parent=31 // pred_check
          %p353 = pneg %p349
        $region128: #{tpu_custom_call.1} parent=31 // pred_check_branch
          %355 = sbr.rel (%p353) target = $region130
        $region129: #{tpu_custom_call.1} parent=31 // pred_region
          %s356 = sshllo.u32 0, 1
          loop: start=0, step=1, limit=1
          $region131: #{tpu_custom_call.1} parent=129 // loop_pre_header
            _
          $region132: #{tpu_custom_call.1} parent=129 // loop_header
            %s358 = sphi 0, %s362
            %p359 = scmp.ge.s32.totalorder %s358, 1
            %s363 = sphi %s345, %s345
            %s364 = sphi %s346, %s346
          $region133: #{tpu_custom_call.1} parent=129 // loop_header_branch
            %361 = sbr.rel (%p359) target = $region137
          $region134: #{tpu_custom_call.1} parent=129 // loop_body
            %v365 = vld [vmem:[%s363] sm:%s356]
            %366 = vst [vmem:[%s364] sm:%s356] %v365
          $region135: #{tpu_custom_call.1} parent=129 // loop_footer
            %s362 = sadd.s32 1, %s358
          $region136: #{tpu_custom_call.1} parent=129 // loop_footer_branch
            %357 = sbr.rel target = $region132
          $region137: #{tpu_custom_call.1} parent=129 // loop_exit
            _
        $region130: #{tpu_custom_call.1} parent=31 // pred_fallthru
          _
        // Predicated region
        $region149: #{tpu_custom_call.1} parent=31 // pred_check
          _
        $region150: #{tpu_custom_call.1} parent=31 // pred_check_branch
          %390 = sbr.rel (0) target = $region152
        $region151: #{tpu_custom_call.1} parent=31 // pred_region
          %391 = vsyncadd %s347, 16
        $region152: #{tpu_custom_call.1} parent=31 // pred_fallthru
          _
        %s392 = sadd.s32 %s198, 4
        %s393 = sld [smem:[#allocation5 + %s392]]
        %s394 = scalar_lea.vmem %s4, %s393
        %s395 = scalar_lea.vmem [#allocation2], 4
        %s396 = scalar_lea.sflag [#allocation3], 4
        %p398 = scmp.lt.u32.totalorder 1, 8
        %p399 = pneg %p398
        // Predicated region
        $region153: #{tpu_custom_call.1} parent=31 // pred_check
          _
        $region154: #{tpu_custom_call.1} parent=31 // pred_check_branch
          %401 = sbr.rel (%p398) target = $region156
        $region155: #{tpu_custom_call.1} parent=31 // pred_region
          %s416 = sand.u32 1, 7
          %p417 = scmp.eq.s32.totalorder %s416, 0
          %p418 = pneg %p417
          // Predicated region
          $region168: #{tpu_custom_call.1} parent=155 // pred_check
            _
          $region169: #{tpu_custom_call.1} parent=155 // pred_check_branch
            %420 = sbr.rel (%p417) target = $region171
          $region170: #{tpu_custom_call.1} parent=155 // pred_region
            %s421 = sand.u32 1, 7
            %s422 = ssub.s32 1, %s421
            %s423 = scalar_lea.vmem %s394, %s422
            %s424 = ssub.s32 1, %s421
            %s425 = scalar_lea.vmem %s395, %s424 [#allocation2]
            %s426 = sshllo.u32 0, %s421
            loop: start=0, step=1, limit=1
            $region172: #{tpu_custom_call.1} parent=170 // loop_pre_header
              _
            $region173: #{tpu_custom_call.1} parent=170 // loop_header
              %s428 = sphi 0, %s432
              %p429 = scmp.ge.s32.totalorder %s428, 1
              %s433 = sphi %s423, %s423
              %s434 = sphi %s425, %s425
            $region174: #{tpu_custom_call.1} parent=170 // loop_header_branch
              %431 = sbr.rel (%p429) target = $region178
            $region175: #{tpu_custom_call.1} parent=170 // loop_body
              %v435 = vld [vmem:[%s433] sm:%s426]
              %436 = vst [vmem:[%s434] sm:%s426] %v435
            $region176: #{tpu_custom_call.1} parent=170 // loop_footer
              %s432 = sadd.s32 1, %s428
            $region177: #{tpu_custom_call.1} parent=170 // loop_footer_branch
              %427 = sbr.rel target = $region173
            $region178: #{tpu_custom_call.1} parent=170 // loop_exit
              _
          $region171: #{tpu_custom_call.1} parent=155 // pred_fallthru
            _
        $region156: #{tpu_custom_call.1} parent=31 // pred_fallthru
          _
        // Predicated region
        $region157: #{tpu_custom_call.1} parent=31 // pred_check
          %p402 = pneg %p398
        $region158: #{tpu_custom_call.1} parent=31 // pred_check_branch
          %404 = sbr.rel (%p402) target = $region160
        $region159: #{tpu_custom_call.1} parent=31 // pred_region
          %s405 = sshllo.u32 0, 1
          loop: start=0, step=1, limit=1
          $region161: #{tpu_custom_call.1} parent=159 // loop_pre_header
            _
          $region162: #{tpu_custom_call.1} parent=159 // loop_header
            %s407 = sphi 0, %s411
            %p408 = scmp.ge.s32.totalorder %s407, 1
            %s412 = sphi %s394, %s394
            %s413 = sphi %s395, %s395
          $region163: #{tpu_custom_call.1} parent=159 // loop_header_branch
            %410 = sbr.rel (%p408) target = $region167
          $region164: #{tpu_custom_call.1} parent=159 // loop_body
            %v414 = vld [vmem:[%s412] sm:%s405]
            %415 = vst [vmem:[%s413] sm:%s405] %v414
          $region165: #{tpu_custom_call.1} parent=159 // loop_footer
            %s411 = sadd.s32 1, %s407
          $region166: #{tpu_custom_call.1} parent=159 // loop_footer_branch
            %406 = sbr.rel target = $region162
          $region167: #{tpu_custom_call.1} parent=159 // loop_exit
            _
        $region160: #{tpu_custom_call.1} parent=31 // pred_fallthru
          _
        // Predicated region
        $region179: #{tpu_custom_call.1} parent=31 // pred_check
          _
        $region180: #{tpu_custom_call.1} parent=31 // pred_check_branch
          %439 = sbr.rel (0) target = $region182
        $region181: #{tpu_custom_call.1} parent=31 // pred_region
          %440 = vsyncadd %s396, 16
        $region182: #{tpu_custom_call.1} parent=31 // pred_fallthru
          _
        %s441 = sadd.s32 %s198, 5
        %s442 = sld [smem:[#allocation5 + %s441]]
        %s443 = scalar_lea.vmem %s4, %s442
        %s444 = scalar_lea.vmem [#allocation2], 5
        %s445 = scalar_lea.sflag [#allocation3], 5
        %p447 = scmp.lt.u32.totalorder 1, 8
        %p448 = pneg %p447
        // Predicated region
        $region183: #{tpu_custom_call.1} parent=31 // pred_check
          _
        $region184: #{tpu_custom_call.1} parent=31 // pred_check_branch
          %450 = sbr.rel (%p447) target = $region186
        $region185: #{tpu_custom_call.1} parent=31 // pred_region
          %s465 = sand.u32 1, 7
          %p466 = scmp.eq.s32.totalorder %s465, 0
          %p467 = pneg %p466
          // Predicated region
          $region198: #{tpu_custom_call.1} parent=185 // pred_check
            _
          $region199: #{tpu_custom_call.1} parent=185 // pred_check_branch
            %469 = sbr.rel (%p466) target = $region201
          $region200: #{tpu_custom_call.1} parent=185 // pred_region
            %s470 = sand.u32 1, 7
            %s471 = ssub.s32 1, %s470
            %s472 = scalar_lea.vmem %s443, %s471
            %s473 = ssub.s32 1, %s470
            %s474 = scalar_lea.vmem %s444, %s473 [#allocation2]
            %s475 = sshllo.u32 0, %s470
            loop: start=0, step=1, limit=1
            $region202: #{tpu_custom_call.1} parent=200 // loop_pre_header
              _
            $region203: #{tpu_custom_call.1} parent=200 // loop_header
              %s477 = sphi 0, %s481
              %p478 = scmp.ge.s32.totalorder %s477, 1
              %s482 = sphi %s472, %s472
              %s483 = sphi %s474, %s474
            $region204: #{tpu_custom_call.1} parent=200 // loop_header_branch
              %480 = sbr.rel (%p478) target = $region208
            $region205: #{tpu_custom_call.1} parent=200 // loop_body
              %v484 = vld [vmem:[%s482] sm:%s475]
              %485 = vst [vmem:[%s483] sm:%s475] %v484
            $region206: #{tpu_custom_call.1} parent=200 // loop_footer
              %s481 = sadd.s32 1, %s477
            $region207: #{tpu_custom_call.1} parent=200 // loop_footer_branch
              %476 = sbr.rel target = $region203
            $region208: #{tpu_custom_call.1} parent=200 // loop_exit
              _
          $region201: #{tpu_custom_call.1} parent=185 // pred_fallthru
            _
        $region186: #{tpu_custom_call.1} parent=31 // pred_fallthru
          _
        // Predicated region
        $region187: #{tpu_custom_call.1} parent=31 // pred_check
          %p451 = pneg %p447
        $region188: #{tpu_custom_call.1} parent=31 // pred_check_branch
          %453 = sbr.rel (%p451) target = $region190
        $region189: #{tpu_custom_call.1} parent=31 // pred_region
          %s454 = sshllo.u32 0, 1
          loop: start=0, step=1, limit=1
          $region191: #{tpu_custom_call.1} parent=189 // loop_pre_header
            _
          $region192: #{tpu_custom_call.1} parent=189 // loop_header
            %s456 = sphi 0, %s460
            %p457 = scmp.ge.s32.totalorder %s456, 1
            %s461 = sphi %s443, %s443
            %s462 = sphi %s444, %s444
          $region193: #{tpu_custom_call.1} parent=189 // loop_header_branch
            %459 = sbr.rel (%p457) target = $region197
          $region194: #{tpu_custom_call.1} parent=189 // loop_body
            %v463 = vld [vmem:[%s461] sm:%s454]
            %464 = vst [vmem:[%s462] sm:%s454] %v463
          $region195: #{tpu_custom_call.1} parent=189 // loop_footer
            %s460 = sadd.s32 1, %s456
          $region196: #{tpu_custom_call.1} parent=189 // loop_footer_branch
            %455 = sbr.rel target = $region192
          $region197: #{tpu_custom_call.1} parent=189 // loop_exit
            _
        $region190: #{tpu_custom_call.1} parent=31 // pred_fallthru
          _
        // Predicated region
        $region209: #{tpu_custom_call.1} parent=31 // pred_check
          _
        $region210: #{tpu_custom_call.1} parent=31 // pred_check_branch
          %488 = sbr.rel (0) target = $region212
        $region211: #{tpu_custom_call.1} parent=31 // pred_region
          %489 = vsyncadd %s445, 16
        $region212: #{tpu_custom_call.1} parent=31 // pred_fallthru
          _
        %s490 = sadd.s32 %s198, 6
        %s491 = sld [smem:[#allocation5 + %s490]]
        %s492 = scalar_lea.vmem %s4, %s491
        %s493 = scalar_lea.vmem [#allocation2], 6
        %s494 = scalar_lea.sflag [#allocation3], 6
        %p496 = scmp.lt.u32.totalorder 1, 8
        %p497 = pneg %p496
        // Predicated region
        $region213: #{tpu_custom_call.1} parent=31 // pred_check
          _
        $region214: #{tpu_custom_call.1} parent=31 // pred_check_branch
          %499 = sbr.rel (%p496) target = $region216
        $region215: #{tpu_custom_call.1} parent=31 // pred_region
          %s514 = sand.u32 1, 7
          %p515 = scmp.eq.s32.totalorder %s514, 0
          %p516 = pneg %p515
          // Predicated region
          $region228: #{tpu_custom_call.1} parent=215 // pred_check
            _
          $region229: #{tpu_custom_call.1} parent=215 // pred_check_branch
            %518 = sbr.rel (%p515) target = $region231
          $region230: #{tpu_custom_call.1} parent=215 // pred_region
            %s519 = sand.u32 1, 7
            %s520 = ssub.s32 1, %s519
            %s521 = scalar_lea.vmem %s492, %s520
            %s522 = ssub.s32 1, %s519
            %s523 = scalar_lea.vmem %s493, %s522 [#allocation2]
            %s524 = sshllo.u32 0, %s519
            loop: start=0, step=1, limit=1
            $region232: #{tpu_custom_call.1} parent=230 // loop_pre_header
              _
            $region233: #{tpu_custom_call.1} parent=230 // loop_header
              %s526 = sphi 0, %s530
              %p527 = scmp.ge.s32.totalorder %s526, 1
              %s531 = sphi %s521, %s521
              %s532 = sphi %s523, %s523
            $region234: #{tpu_custom_call.1} parent=230 // loop_header_branch
              %529 = sbr.rel (%p527) target = $region238
            $region235: #{tpu_custom_call.1} parent=230 // loop_body
              %v533 = vld [vmem:[%s531] sm:%s524]
              %534 = vst [vmem:[%s532] sm:%s524] %v533
            $region236: #{tpu_custom_call.1} parent=230 // loop_footer
              %s530 = sadd.s32 1, %s526
            $region237: #{tpu_custom_call.1} parent=230 // loop_footer_branch
              %525 = sbr.rel target = $region233
            $region238: #{tpu_custom_call.1} parent=230 // loop_exit
              _
          $region231: #{tpu_custom_call.1} parent=215 // pred_fallthru
            _
        $region216: #{tpu_custom_call.1} parent=31 // pred_fallthru
          _
        // Predicated region
        $region217: #{tpu_custom_call.1} parent=31 // pred_check
          %p500 = pneg %p496
        $region218: #{tpu_custom_call.1} parent=31 // pred_check_branch
          %502 = sbr.rel (%p500) target = $region220
        $region219: #{tpu_custom_call.1} parent=31 // pred_region
          %s503 = sshllo.u32 0, 1
          loop: start=0, step=1, limit=1
          $region221: #{tpu_custom_call.1} parent=219 // loop_pre_header
            _
          $region222: #{tpu_custom_call.1} parent=219 // loop_header
            %s505 = sphi 0, %s509
            %p506 = scmp.ge.s32.totalorder %s505, 1
            %s510 = sphi %s492, %s492
            %s511 = sphi %s493, %s493
          $region223: #{tpu_custom_call.1} parent=219 // loop_header_branch
            %508 = sbr.rel (%p506) target = $region227
          $region224: #{tpu_custom_call.1} parent=219 // loop_body
            %v512 = vld [vmem:[%s510] sm:%s503]
            %513 = vst [vmem:[%s511] sm:%s503] %v512
          $region225: #{tpu_custom_call.1} parent=219 // loop_footer
            %s509 = sadd.s32 1, %s505
          $region226: #{tpu_custom_call.1} parent=219 // loop_footer_branch
            %504 = sbr.rel target = $region222
          $region227: #{tpu_custom_call.1} parent=219 // loop_exit
            _
        $region220: #{tpu_custom_call.1} parent=31 // pred_fallthru
          _
        // Predicated region
        $region239: #{tpu_custom_call.1} parent=31 // pred_check
          _
        $region240: #{tpu_custom_call.1} parent=31 // pred_check_branch
          %537 = sbr.rel (0) target = $region242
        $region241: #{tpu_custom_call.1} parent=31 // pred_region
          %538 = vsyncadd %s494, 16
        $region242: #{tpu_custom_call.1} parent=31 // pred_fallthru
          _
        %s539 = sadd.s32 %s198, 7
        %s540 = sld [smem:[#allocation5 + %s539]]
        %s541 = scalar_lea.vmem %s4, %s540
        %s542 = scalar_lea.vmem [#allocation2], 7
        %s543 = scalar_lea.sflag [#allocation3], 7
        %p545 = scmp.lt.u32.totalorder 1, 8
        %p546 = pneg %p545
        // Predicated region
        $region243: #{tpu_custom_call.1} parent=31 // pred_check
          _
        $region244: #{tpu_custom_call.1} parent=31 // pred_check_branch
          %548 = sbr.rel (%p545) target = $region246
        $region245: #{tpu_custom_call.1} parent=31 // pred_region
          %s563 = sand.u32 1, 7
          %p564 = scmp.eq.s32.totalorder %s563, 0
          %p565 = pneg %p564
          // Predicated region
          $region258: #{tpu_custom_call.1} parent=245 // pred_check
            _
          $region259: #{tpu_custom_call.1} parent=245 // pred_check_branch
            %567 = sbr.rel (%p564) target = $region261
          $region260: #{tpu_custom_call.1} parent=245 // pred_region
            %s568 = sand.u32 1, 7
            %s569 = ssub.s32 1, %s568
            %s570 = scalar_lea.vmem %s541, %s569
            %s571 = ssub.s32 1, %s568
            %s572 = scalar_lea.vmem %s542, %s571 [#allocation2]
            %s573 = sshllo.u32 0, %s568
            loop: start=0, step=1, limit=1
            $region262: #{tpu_custom_call.1} parent=260 // loop_pre_header
              _
            $region263: #{tpu_custom_call.1} parent=260 // loop_header
              %s575 = sphi 0, %s579
              %p576 = scmp.ge.s32.totalorder %s575, 1
              %s580 = sphi %s570, %s570
              %s581 = sphi %s572, %s572
            $region264: #{tpu_custom_call.1} parent=260 // loop_header_branch
              %578 = sbr.rel (%p576) target = $region268
            $region265: #{tpu_custom_call.1} parent=260 // loop_body
              %v582 = vld [vmem:[%s580] sm:%s573]
              %583 = vst [vmem:[%s581] sm:%s573] %v582
            $region266: #{tpu_custom_call.1} parent=260 // loop_footer
              %s579 = sadd.s32 1, %s575
            $region267: #{tpu_custom_call.1} parent=260 // loop_footer_branch
              %574 = sbr.rel target = $region263
            $region268: #{tpu_custom_call.1} parent=260 // loop_exit
              _
          $region261: #{tpu_custom_call.1} parent=245 // pred_fallthru
            _
        $region246: #{tpu_custom_call.1} parent=31 // pred_fallthru
          _
        // Predicated region
        $region247: #{tpu_custom_call.1} parent=31 // pred_check
          %p549 = pneg %p545
        $region248: #{tpu_custom_call.1} parent=31 // pred_check_branch
          %551 = sbr.rel (%p549) target = $region250
        $region249: #{tpu_custom_call.1} parent=31 // pred_region
          %s552 = sshllo.u32 0, 1
          loop: start=0, step=1, limit=1
          $region251: #{tpu_custom_call.1} parent=249 // loop_pre_header
            _
          $region252: #{tpu_custom_call.1} parent=249 // loop_header
            %s554 = sphi 0, %s558
            %p555 = scmp.ge.s32.totalorder %s554, 1
            %s559 = sphi %s541, %s541
            %s560 = sphi %s542, %s542
          $region253: #{tpu_custom_call.1} parent=249 // loop_header_branch
            %557 = sbr.rel (%p555) target = $region257
          $region254: #{tpu_custom_call.1} parent=249 // loop_body
            %v561 = vld [vmem:[%s559] sm:%s552]
            %562 = vst [vmem:[%s560] sm:%s552] %v561
          $region255: #{tpu_custom_call.1} parent=249 // loop_footer
            %s558 = sadd.s32 1, %s554
          $region256: #{tpu_custom_call.1} parent=249 // loop_footer_branch
            %553 = sbr.rel target = $region252
          $region257: #{tpu_custom_call.1} parent=249 // loop_exit
            _
        $region250: #{tpu_custom_call.1} parent=31 // pred_fallthru
          _
        // Predicated region
        $region269: #{tpu_custom_call.1} parent=31 // pred_check
          _
        $region270: #{tpu_custom_call.1} parent=31 // pred_check_branch
          %586 = sbr.rel (0) target = $region272
        $region271: #{tpu_custom_call.1} parent=31 // pred_region
          %587 = vsyncadd %s543, 16
        $region272: #{tpu_custom_call.1} parent=31 // pred_fallthru
          _
        %s588 = smul.u32 1, 1
        %s589 = sshll.u32 %s588, 4
        %590 = dma.done [#allocation3], %s589
        %s591 = sshll.u32 %s588, 4
        %592 = dma.done %s249, %s591
        %s593 = sshll.u32 %s588, 4
        %594 = dma.done %s298, %s593
        %s595 = sshll.u32 %s588, 4
        %596 = dma.done %s347, %s595
        %s597 = sshll.u32 %s588, 4
        %598 = dma.done %s396, %s597
        %s599 = sshll.u32 %s588, 4
        %600 = dma.done %s445, %s599
        %s601 = sshll.u32 %s588, 4
        %602 = dma.done %s494, %s601
        %s603 = sshll.u32 %s588, 4
        %604 = dma.done %s543, %s603
        %v605 = vld [vmem:[#allocation2] sm:$0xff]
        %v606 = vld [vmem:[%s191] sm:$0x1]
        %vm607 = vcmask 261120
        %v609 = vsel %vm607, %v606, 0
        %v612 = vsel %vm607, %v605, 0
        %614 = vmatprep.subr.mxu0 0.0
        %615 = vmatpush1.xpose.msra.mxu0 %v612
        %616 = vmatprep.subr.mxu0 0.0
        %617 = vmatpush1.xpose.msra.mxu0 0.0
        %618 = vmatprep.subr.mxu0 0.0
        %619 = vmatpush1.xpose.msra.mxu0 0.0
        %620 = vmatprep.subr.mxu0 0.0
        %621 = vmatpush1.xpose.msra.mxu0 0.0
        %622 = vmatprep.subr.mxu0 0.0
        %623 = vmatpush1.xpose.msra.mxu0 0.0
        %624 = vmatprep.subr.mxu0 0.0
        %625 = vmatpush1.xpose.msra.mxu0 0.0
        %626 = vmatprep.subr.mxu0 0.0
        %627 = vmatpush1.xpose.msra.mxu0 0.0
        %628 = vmatprep.subr.mxu0 0.0
        %629 = vmatpush1.xpose.msra.mxu0 0.0
        %630 = vmatprep.subr.mxu0 0.0
        %631 = vmatpush1.xpose.msra.mxu0 0.0
        %632 = vmatprep.subr.mxu0 0.0
        %633 = vmatpush1.xpose.msra.mxu0 0.0
        %634 = vmatprep.subr.mxu0 0.0
        %635 = vmatpush1.xpose.msra.mxu0 0.0
        %636 = vmatprep.subr.mxu0 0.0
        %637 = vmatpush1.xpose.msra.mxu0 0.0
        %638 = vmatprep.subr.mxu0 0.0
        %639 = vmatpush1.xpose.msra.mxu0 0.0
        %640 = vmatprep.subr.mxu0 0.0
        %641 = vmatpush1.xpose.msra.mxu0 0.0
        %642 = vmatprep.subr.mxu0 0.0
        %643 = vmatpush1.xpose.msra.mxu0 0.0
        %644 = vmatprep.subr.mxu0 0.0
        %645 = vmatpush1.xpose.msra.mxu0 0.0
        %646 = vmatprep.subr.mxu0 0.0
        %647 = vmatpush1.xpose.msra.mxu0 0.0
        %648 = vmatprep.subr.mxu0 0.0
        %649 = vmatpush1.xpose.msra.mxu0 0.0
        %650 = vmatprep.subr.mxu0 0.0
        %651 = vmatpush1.xpose.msra.mxu0 0.0
        %652 = vmatprep.subr.mxu0 0.0
        %653 = vmatpush1.xpose.msra.mxu0 0.0
        %654 = vmatprep.subr.mxu0 0.0
        %655 = vmatpush1.xpose.msra.mxu0 0.0
        %656 = vmatprep.subr.mxu0 0.0
        %657 = vmatpush1.xpose.msra.mxu0 0.0
        %658 = vmatprep.subr.mxu0 0.0
        %659 = vmatpush1.xpose.msra.mxu0 0.0
        %660 = vmatprep.subr.mxu0 0.0
        %661 = vmatpush1.xpose.msra.mxu0 0.0
        %662 = vmatprep.subr.mxu0 0.0
        %663 = vmatpush1.xpose.msra.mxu0 0.0
        %664 = vmatprep.subr.mxu0 0.0
        %665 = vmatpush1.xpose.msra.mxu0 0.0
        %666 = vmatprep.subr.mxu0 0.0
        %667 = vmatpush1.xpose.msra.mxu0 0.0
        %668 = vmatprep.subr.mxu0 0.0
        %669 = vmatpush1.xpose.msra.mxu0 0.0
        %670 = vmatprep.subr.mxu0 0.0
        %671 = vmatpush1.xpose.msra.mxu0 0.0
        %672 = vmatprep.subr.mxu0 0.0
        %673 = vmatpush1.xpose.msra.mxu0 0.0
        %674 = vmatprep.subr.mxu0 0.0
        %675 = vmatpush1.xpose.msra.mxu0 0.0
        %676 = vmatprep.subr.mxu0 0.0
        %677 = vmatpush1.xpose.msra.mxu0 0.0
        %678 = vmatprep.mubr.f32.mxu0 0.0
        %679 = vmatmul.mubr.f32.gmra.mrb[0].mxu0 %v609
        %v680 = vpop.f32.mrb[0].mxu0
        %v681 = vadd.f32 0.0, %v680
        %v682 = vpop.f32.mrb[0].mxu0
        %683 = vdwg.mxu0
        %v684 = vld [vmem:[%s194] sm:$0x1]
        %v685 = vld [vmem:[%s197] sm:$0x1]
        %v686 = vmax.f32 %v681, 0.0
        %v687 = vmul.f32 %v681, %v684
        %v688 = vsub.f32 %v686, %v687
        %v689 = vand.u32 2147483647, %v681
        %v690 = vsub.f32 0.0, %v689
        %v691 = vmul.f32 %v690, 1.442695
        %v692 = vpow.pop %v691
        %v693 = vadd.f32 %v692, 1.0
        %v694 = vlog2.pop %v693
        %v695 = vmul.f32 %v694, 0.6931472
        %v696 = vmul.f32 -0.5, %v692
        %v697 = vadd.f32 %v696, 1.0
        %v698 = vmul.f32 %v697, %v692
        %v699 = vand.u32 2147483647, %v692
        %vm700 = vcmp.lt.f32.partialorder %v699, 0.0004427343
        %v701 = vsel %vm700, %v698, %v695
        %v702 = vadd.f32 %v688, %v701
        %v703 = vmul.f32 %v702, %v685
        %vm704 = vcmask 57344
        %v705 = vsel %vm704, %v703, 0.0
        %706 = vadd.xlane.f32.xlu0 %v705
        %v707 = vpop.xlane.xlu0 %706
        %v708 = vrot.slane %v707, 4
        %v709 = vadd.f32 %v707, %v708
        %v710 = vrot.slane %v709, 2
        %v711 = vadd.f32 %v709, %v710
        %v712 = vrot.slane %v711, 1
        %v713 = vadd.f32 %v711, %v712
        %s714 = vtos %v713
        %v715 = vmul.f32 %v606, %v606
        %vm716 = vcmask 253952
        %v717 = vsel %vm716, %v715, 0.0
        %718 = vadd.xlane.f32.xlu0 %v717
        %v719 = vpop.xlane.xlu0 %718
        %v720 = vrot.slane %v719, 4
        %v721 = vadd.f32 %v719, %v720
        %v722 = vrot.slane %v721, 2
        %v723 = vadd.f32 %v721, %v722
        %v724 = vrot.slane %v723, 1
        %v725 = vadd.f32 %v723, %v724
        %s726 = vtos %v725
        %v727 = vmul.f32 %v605, %v605
        %v728 = vsel %vm607, %v727, 0.0
        %729 = vadd.xlane.f32.xlu0 %v728
        %v730 = vpop.xlane.xlu0 %729
        %v731 = vrot.slane %v730, 4
        %v732 = vadd.f32 %v730, %v731
        %v733 = vrot.slane %v732, 2
        %v734 = vadd.f32 %v732, %v733
        %v735 = vrot.slane %v734, 1
        %v736 = vadd.f32 %v734, %v735
        %s737 = vtos %v736
        %v738 = vlaneseq
        %v739 = vand.u32 %v738, 127
        %vm740 = vcmp.eq.s32.totalorder %v739, 0
        %vm741 = vcmp.eq.s32.totalorder %v739, 1
        %vm742 = vcmp.eq.s32.totalorder %v739, 2
        %v743 = vstv %s737
        %v744 = vsel %vm742, %v743, 0.0
        %v745 = vstv %s726
        %v746 = vsel %vm741, %v745, %v744
        %v747 = vstv %s714
        %v748 = vsel %vm740, %v747, %v746
        %749 = vst [vmem:[%s188] sm:$0x1] %v748
        %s750 = sand.u32 %s111, 1
        %s751 = scalar_lea.sflag [#allocation7], %s750
        %s752 = sand.u32 %s111, 1
        %s753 = scalar_lea.vmem [#allocation6], %s752
        // Predicated region
        $region273: #{tpu_custom_call.1} parent=31 // pred_check
          %p754 = pneg %p121
        $region274: #{tpu_custom_call.1} parent=31 // pred_check_branch
          %756 = sbr.rel (%p754) target = $region276
        $region275: #{tpu_custom_call.1} parent=31 // pred_region
          %s758 = ssub.s32 16, 16
          %759 = vsyncadd %s751, %s758
          %s760 = smul.addr %s25, 16
          %s761 = scalar_lea.hbm %s5, %s760
          %s763 = sshll.u32 %s753, 4
          %s764 = int_to_ptr.vmem [resolvable:$true] %s763
          %766 = dma.vmem_to_hbm [thread:$0]  %s764, 16, %s761, %s751
        $region276: #{tpu_custom_call.1} parent=31 // pred_fallthru
          _
      $region32: #{tpu_custom_call.1} parent=5 // pred_fallthru
        _
      %p767 = scmp.le.s32.totalorder 2, %s20
      // Predicated region
      $region277: #{tpu_custom_call.1} parent=5 // pred_check
        %p768 = pneg %p767
      $region278: #{tpu_custom_call.1} parent=5 // pred_check_branch
        %770 = sbr.rel (%p768) target = $region280
      $region279: #{tpu_custom_call.1} parent=5 // pred_region
        %s771 = ssub.s32 %s20, 2
        // Predicated region
        $region281: #{tpu_custom_call.1} parent=279 // pred_check
          %p772 = pneg %p127
        $region282: #{tpu_custom_call.1} parent=279 // pred_check_branch
          %774 = sbr.rel (%p772) target = $region284
        $region283: #{tpu_custom_call.1} parent=279 // pred_region
          %s775 = sand.u32 %s112, 1
          %s776 = scalar_lea.sflag [#allocation7], %s775
          %s777 = sand.u32 %s112, 1
          %s778 = scalar_lea.vmem [#allocation6], %s777
          %779 = dma.done %s776, 16
        $region284: #{tpu_custom_call.1} parent=279 // pred_fallthru
          _
      $region280: #{tpu_custom_call.1} parent=5 // pred_fallthru
        _
    $region6: #{tpu_custom_call.1} parent=1 // loop_footer
      %s24 = sadd.s32 1, %s20
    $region7: #{tpu_custom_call.1} parent=1 // loop_footer_branch
      %19 = sbr.rel target = $region3
    $region8: #{tpu_custom_call.1} parent=1 // loop_exit
      _
    %780 = vsyncpa [#allocation7], 1
    %s781 = scalar_lea.sflag [#allocation7], 1
    %782 = vsyncpa %s781, 1
  %783 = vsyncmov [#allocation3]
  %s784 = vpop.sfrf %783
  %p785 = scmp.eq.s32.totalorder %s784, 0
  %p786 = pneg %p785
  %788 = shalt.err (%p786)
  %s789 = scalar_lea.sflag [#allocation3], 1
  %790 = vsyncmov %s789
  %s791 = vpop.sfrf %790
  %p792 = scmp.eq.s32.totalorder %s791, 0
  %p793 = pneg %p792
  %795 = shalt.err (%p793)
  %s796 = scalar_lea.sflag [#allocation3], 2
  %797 = vsyncmov %s796
  %s798 = vpop.sfrf %797
  %p799 = scmp.eq.s32.totalorder %s798, 0
  %p800 = pneg %p799
  %802 = shalt.err (%p800)
  %s803 = scalar_lea.sflag [#allocation3], 3
  %804 = vsyncmov %s803
  %s805 = vpop.sfrf %804
  %p806 = scmp.eq.s32.totalorder %s805, 0
  %p807 = pneg %p806
  %809 = shalt.err (%p807)
  %s810 = scalar_lea.sflag [#allocation3], 4
  %811 = vsyncmov %s810
  %s812 = vpop.sfrf %811
  %p813 = scmp.eq.s32.totalorder %s812, 0
  %p814 = pneg %p813
  %816 = shalt.err (%p814)
  %s817 = scalar_lea.sflag [#allocation3], 5
  %818 = vsyncmov %s817
  %s819 = vpop.sfrf %818
  %p820 = scmp.eq.s32.totalorder %s819, 0
  %p821 = pneg %p820
  %823 = shalt.err (%p821)
  %s824 = scalar_lea.sflag [#allocation3], 6
  %825 = vsyncmov %s824
  %s826 = vpop.sfrf %825
  %p827 = scmp.eq.s32.totalorder %s826, 0
  %p828 = pneg %p827
  %830 = shalt.err (%p828)
  %s831 = scalar_lea.sflag [#allocation3], 7
  %832 = vsyncmov %s831
  %s833 = vpop.sfrf %832
  %p834 = scmp.eq.s32.totalorder %s833, 0
  %p835 = pneg %p834
  %837 = shalt.err (%p835)

</llo_original>
